<compile_context>
chip_gen: v7x
topology: tpu7x:2x2x1
jax: 0.10.0
libtpu: 0.0.40
codegen_flags: <defaults>
</compile_context>

<pallas_src>
import jax
import jax.numpy as jnp
from jax.experimental import pallas as pl
from jax.experimental.pallas import tpu as pltpu


def _round_up(v, m):
    return (v + m - 1) // m * m


def _pick_batch_block(n):
    """Images per grid step: full batch if small, else largest divisor <= 8."""
    if n <= 8:
        return n
    for cand in (8, 4, 2):
        if n % cand == 0:
            return cand
    return 1


def get_mask_g_forward(x_nchw, weight):
    """GET_MASK_G forward: sigmoid(conv3x3(x)), Cout=1, no bias.

    x_nchw: (N, C, H, W) float32; weight: (1, C, 3, 3) float32.
    Returns (N, 1, H, W) float32.
    """
    N, C, H, W = x_nchw.shape
    assert weight.shape == (1, C, 3, 3)

    Hp, Wp = H + 2, W + 2
    # conv is evaluated over an (H, W+2)-wide slab; the 2 extra cols are cropped
    LOUT = _round_up(H * Wp, 128)          # lane-dense output slab width
    max_off = 2 * Wp + 2                   # largest tap shift: (dy, dx) = (2, 2)
    need = LOUT + max_off                  # flat lanes every tap slice may touch
    extra_rows = max(0, -(-(need - Hp * Wp) // Wp))
    LP = (Hp + extra_rows) * Wp            # full flat-plane length

    # --- wrapper-side layout plumbing: ONE pad (+ fused bf16 cast) ---
    # top/left halo of 1, bottom halo of 1 + extra rows that double as the
    # flat-plane tail padding; reshape to the flat plane is free.
    xflat = jnp.pad(
        x_nchw.astype(jnp.bfloat16),
        ((0, 0), (0, 0), (1, 1 + extra_rows), (1, 1)),
    ).reshape(N, C, LP)

    # wmat[tap, c] = weight[0, c, dy, dx] with tap = dy*3 + dx
    wmat = jnp.transpose(weight[0], (1, 2, 0)).reshape(9, C).astype(jnp.bfloat16)

    B = _pick_batch_block(N)

    def kernel(xflat_ref, wmat_ref, out_ref):
        # xflat_ref: (B, C, LP)  bf16 channel-major, spatially padded flat plane
        # wmat_ref : (9, C)      bf16 conv weights, tap-major
        # out_ref  : (B, LOUT)   f32 lane-dense conv+sigmoid output slab
        rows = []
        for b in range(B):
            acc = None
            for tap in range(9):
                dy, dx = divmod(tap, 3)
                off = dy * Wp + dx
                # shift-and-crop tap: pure lane slice feeding the MXU directly
                p = jnp.dot(wmat_ref[tap:tap + 1, :],
                            xflat_ref[b, :, off:off + LOUT],
                            preferred_element_type=jnp.float32)
                acc = p if acc is None else acc + p
            rows.append(acc)
        acc_all = rows[0] if B == 1 else jnp.concatenate(rows, axis=0)
        # sigmoid(x) = 1 / (1 + exp(-x)); exp and approx recip both live on EUP
        out_ref[...] = pl.reciprocal(1.0 + jnp.exp(-acc_all), approx=True)

    out_flat = pl.pallas_call(
        kernel,
        out_shape=jax.ShapeDtypeStruct((N, LOUT), jnp.float32),
        grid_spec=pltpu.PrefetchScalarGridSpec(
            num_scalar_prefetch=0,
            grid=(N // B,),
            in_specs=[
                pl.BlockSpec((B, C, LP), lambda n: (n, 0, 0)),
                pl.BlockSpec((9, C), lambda n: (0, 0)),
            ],
            out_specs=pl.BlockSpec((B, LOUT), lambda n: (n, 0)),
        ),
        compiler_params=pltpu.CompilerParams(
            dimension_semantics=("parallel",)),
    )(xflat, wmat)

    # crop the (W+2)-wide slab back to W and drop the lane padding
    out = out_flat[:, :H * Wp].reshape(N, H, Wp)[:, :, :W]
    return out[:, None, :, :]                                    # (N, 1, H, W)


def get_mask_g_reference(x_nchw, weight):
    """Pure-JAX reference for correctness checking."""
    y = jax.lax.conv_general_dilated(
        x_nchw, weight, window_strides=(1, 1), padding="SAME",
        dimension_numbers=("NCHW", "OIHW", "NCHW"))
    return jax.nn.sigmoid(y)


if __name__ == "__main__":
    N, C, H, W = 2, 16, 16, 16          # ngf = 16
    key = jax.random.PRNGKey(0)
    kx, kw = jax.random.split(key)
    x = jax.random.normal(kx, (N, C, H, W), jnp.float32)
    weight = 0.1 * jax.random.normal(kw, (1, C, 3, 3), jnp.float32)

    out = jax.block_until_ready(get_mask_g_forward(x, weight))
    ref = jax.block_until_ready(get_mask_g_reference(x, weight))

    assert out.shape == (N, 1, H, W), out.shape
    err = float(jnp.max(jnp.abs(out - ref)))
    # bf16 MXU operands (f32 accumulate) + approx reciprocal vs f32 reference
    assert err < 1e-2, err
    print("KERNEL_OK")
</pallas_src>

<mosaic_0001>
module attributes {stable_mosaic.version = 11 : i64} {
  func.func @kernel(%arg0: i32, %arg1: memref<2x16x432xbf16, #tpu.memory_space<vmem>>, %arg2: memref<9x16xbf16, #tpu.memory_space<vmem>>, %arg3: memref<2x384xf32, #tpu.memory_space<vmem>>) attributes {dimension_semantics = [#tpu.dimension_semantics<parallel>], iteration_bounds = array<i64: 1>, scalar_prefetch = 0 : i64, scratch_operands = 0 : i64, tpu.core_type = #tpu.core_type<tc>, window_params = [{transform_indices = @transform_0, window_bounds = array<i64: 2, 16, 432>}, {pipeline_mode = #tpu.pipeline_mode<synchronous>, transform_indices = @transform_1, window_bounds = array<i64: 9, 16>}, {transform_indices = @transform_2, window_bounds = array<i64: 2, 384>}]} {
    %c0 = arith.constant 0 : index
    %c0_0 = arith.constant 0 : index
    %0 = vector.load %arg2[%c0, %c0_0] : memref<9x16xbf16, #tpu.memory_space<vmem>>, vector<1x16xbf16>
    %c0_1 = arith.constant 0 : index
    %c0_2 = arith.constant 0 : index
    %c0_3 = arith.constant 0 : index
    %1 = vector.load %arg1[%c0_1, %c0_2, %c0_3] : memref<2x16x432xbf16, #tpu.memory_space<vmem>>, vector<1x16x384xbf16>
    %2 = vector.shape_cast %1 : vector<1x16x384xbf16> to vector<16x384xbf16>
    %cst = arith.constant dense<0.000000e+00> : vector<1x384xf32>
    %3 = tpu.matmul %0, %2, %cst {dimension_numbers = #tpu.dot_dimension_numbers<[1], [0], [0], [1], [0, 0, 1, 1], [], []>} : vector<1x16xbf16>, vector<16x384xbf16>, vector<1x384xf32> -> vector<1x384xf32>
    %c1 = arith.constant 1 : index
    %c0_4 = arith.constant 0 : index
    %4 = vector.load %arg2[%c1, %c0_4] : memref<9x16xbf16, #tpu.memory_space<vmem>>, vector<1x16xbf16>
    %c0_5 = arith.constant 0 : index
    %c0_6 = arith.constant 0 : index
    %c1_7 = arith.constant 1 : index
    %5 = vector.load %arg1[%c0_5, %c0_6, %c1_7] : memref<2x16x432xbf16, #tpu.memory_space<vmem>>, vector<1x16x384xbf16>
    %6 = vector.shape_cast %5 : vector<1x16x384xbf16> to vector<16x384xbf16>
    %cst_8 = arith.constant dense<0.000000e+00> : vector<1x384xf32>
    %7 = tpu.matmul %4, %6, %cst_8 {dimension_numbers = #tpu.dot_dimension_numbers<[1], [0], [0], [1], [0, 0, 1, 1], [], []>} : vector<1x16xbf16>, vector<16x384xbf16>, vector<1x384xf32> -> vector<1x384xf32>
    %8 = arith.addf %3, %7 : vector<1x384xf32>
    %c2 = arith.constant 2 : index
    %c0_9 = arith.constant 0 : index
    %9 = vector.load %arg2[%c2, %c0_9] : memref<9x16xbf16, #tpu.memory_space<vmem>>, vector<1x16xbf16>
    %c0_10 = arith.constant 0 : index
    %c0_11 = arith.constant 0 : index
    %c2_12 = arith.constant 2 : index
    %10 = vector.load %arg1[%c0_10, %c0_11, %c2_12] : memref<2x16x432xbf16, #tpu.memory_space<vmem>>, vector<1x16x384xbf16>
    %11 = vector.shape_cast %10 : vector<1x16x384xbf16> to vector<16x384xbf16>
    %cst_13 = arith.constant dense<0.000000e+00> : vector<1x384xf32>
    %12 = tpu.matmul %9, %11, %cst_13 {dimension_numbers = #tpu.dot_dimension_numbers<[1], [0], [0], [1], [0, 0, 1, 1], [], []>} : vector<1x16xbf16>, vector<16x384xbf16>, vector<1x384xf32> -> vector<1x384xf32>
    %13 = arith.addf %8, %12 : vector<1x384xf32>
    %c3 = arith.constant 3 : index
    %c0_14 = arith.constant 0 : index
    %14 = vector.load %arg2[%c3, %c0_14] : memref<9x16xbf16, #tpu.memory_space<vmem>>, vector<1x16xbf16>
    %c0_15 = arith.constant 0 : index
    %c0_16 = arith.constant 0 : index
    %c18 = arith.constant 18 : index
    %15 = vector.load %arg1[%c0_15, %c0_16, %c18] : memref<2x16x432xbf16, #tpu.memory_space<vmem>>, vector<1x16x384xbf16>
    %16 = vector.shape_cast %15 : vector<1x16x384xbf16> to vector<16x384xbf16>
    %cst_17 = arith.constant dense<0.000000e+00> : vector<1x384xf32>
    %17 = tpu.matmul %14, %16, %cst_17 {dimension_numbers = #tpu.dot_dimension_numbers<[1], [0], [0], [1], [0, 0, 1, 1], [], []>} : vector<1x16xbf16>, vector<16x384xbf16>, vector<1x384xf32> -> vector<1x384xf32>
    %18 = arith.addf %13, %17 : vector<1x384xf32>
    %c4 = arith.constant 4 : index
    %c0_18 = arith.constant 0 : index
    %19 = vector.load %arg2[%c4, %c0_18] : memref<9x16xbf16, #tpu.memory_space<vmem>>, vector<1x16xbf16>
    %c0_19 = arith.constant 0 : index
    %c0_20 = arith.constant 0 : index
    %c19 = arith.constant 19 : index
    %20 = vector.load %arg1[%c0_19, %c0_20, %c19] : memref<2x16x432xbf16, #tpu.memory_space<vmem>>, vector<1x16x384xbf16>
    %21 = vector.shape_cast %20 : vector<1x16x384xbf16> to vector<16x384xbf16>
    %cst_21 = arith.constant dense<0.000000e+00> : vector<1x384xf32>
    %22 = tpu.matmul %19, %21, %cst_21 {dimension_numbers = #tpu.dot_dimension_numbers<[1], [0], [0], [1], [0, 0, 1, 1], [], []>} : vector<1x16xbf16>, vector<16x384xbf16>, vector<1x384xf32> -> vector<1x384xf32>
    %23 = arith.addf %18, %22 : vector<1x384xf32>
    %c5 = arith.constant 5 : index
    %c0_22 = arith.constant 0 : index
    %24 = vector.load %arg2[%c5, %c0_22] : memref<9x16xbf16, #tpu.memory_space<vmem>>, vector<1x16xbf16>
    %c0_23 = arith.constant 0 : index
    %c0_24 = arith.constant 0 : index
    %c20 = arith.constant 20 : index
    %25 = vector.load %arg1[%c0_23, %c0_24, %c20] : memref<2x16x432xbf16, #tpu.memory_space<vmem>>, vector<1x16x384xbf16>
    %26 = vector.shape_cast %25 : vector<1x16x384xbf16> to vector<16x384xbf16>
    %cst_25 = arith.constant dense<0.000000e+00> : vector<1x384xf32>
    %27 = tpu.matmul %24, %26, %cst_25 {dimension_numbers = #tpu.dot_dimension_numbers<[1], [0], [0], [1], [0, 0, 1, 1], [], []>} : vector<1x16xbf16>, vector<16x384xbf16>, vector<1x384xf32> -> vector<1x384xf32>
    %28 = arith.addf %23, %27 : vector<1x384xf32>
    %c6 = arith.constant 6 : index
    %c0_26 = arith.constant 0 : index
    %29 = vector.load %arg2[%c6, %c0_26] : memref<9x16xbf16, #tpu.memory_space<vmem>>, vector<1x16xbf16>
    %c0_27 = arith.constant 0 : index
    %c0_28 = arith.constant 0 : index
    %c36 = arith.constant 36 : index
    %30 = vector.load %arg1[%c0_27, %c0_28, %c36] : memref<2x16x432xbf16, #tpu.memory_space<vmem>>, vector<1x16x384xbf16>
    %31 = vector.shape_cast %30 : vector<1x16x384xbf16> to vector<16x384xbf16>
    %cst_29 = arith.constant dense<0.000000e+00> : vector<1x384xf32>
    %32 = tpu.matmul %29, %31, %cst_29 {dimension_numbers = #tpu.dot_dimension_numbers<[1], [0], [0], [1], [0, 0, 1, 1], [], []>} : vector<1x16xbf16>, vector<16x384xbf16>, vector<1x384xf32> -> vector<1x384xf32>
    %33 = arith.addf %28, %32 : vector<1x384xf32>
    %c7 = arith.constant 7 : index
    %c0_30 = arith.constant 0 : index
    %34 = vector.load %arg2[%c7, %c0_30] : memref<9x16xbf16, #tpu.memory_space<vmem>>, vector<1x16xbf16>
    %c0_31 = arith.constant 0 : index
    %c0_32 = arith.constant 0 : index
    %c37 = arith.constant 37 : index
    %35 = vector.load %arg1[%c0_31, %c0_32, %c37] : memref<2x16x432xbf16, #tpu.memory_space<vmem>>, vector<1x16x384xbf16>
    %36 = vector.shape_cast %35 : vector<1x16x384xbf16> to vector<16x384xbf16>
    %cst_33 = arith.constant dense<0.000000e+00> : vector<1x384xf32>
    %37 = tpu.matmul %34, %36, %cst_33 {dimension_numbers = #tpu.dot_dimension_numbers<[1], [0], [0], [1], [0, 0, 1, 1], [], []>} : vector<1x16xbf16>, vector<16x384xbf16>, vector<1x384xf32> -> vector<1x384xf32>
    %38 = arith.addf %33, %37 : vector<1x384xf32>
    %c8 = arith.constant 8 : index
    %c0_34 = arith.constant 0 : index
    %39 = vector.load %arg2[%c8, %c0_34] : memref<9x16xbf16, #tpu.memory_space<vmem>>, vector<1x16xbf16>
    %c0_35 = arith.constant 0 : index
    %c0_36 = arith.constant 0 : index
    %c38 = arith.constant 38 : index
    %40 = vector.load %arg1[%c0_35, %c0_36, %c38] : memref<2x16x432xbf16, #tpu.memory_space<vmem>>, vector<1x16x384xbf16>
    %41 = vector.shape_cast %40 : vector<1x16x384xbf16> to vector<16x384xbf16>
    %cst_37 = arith.constant dense<0.000000e+00> : vector<1x384xf32>
    %42 = tpu.matmul %39, %41, %cst_37 {dimension_numbers = #tpu.dot_dimension_numbers<[1], [0], [0], [1], [0, 0, 1, 1], [], []>} : vector<1x16xbf16>, vector<16x384xbf16>, vector<1x384xf32> -> vector<1x384xf32>
    %43 = arith.addf %38, %42 : vector<1x384xf32>
    %c0_38 = arith.constant 0 : index
    %c0_39 = arith.constant 0 : index
    %44 = vector.load %arg2[%c0_38, %c0_39] : memref<9x16xbf16, #tpu.memory_space<vmem>>, vector<1x16xbf16>
    %c1_40 = arith.constant 1 : index
    %c0_41 = arith.constant 0 : index
    %c0_42 = arith.constant 0 : index
    %45 = vector.load %arg1[%c1_40, %c0_41, %c0_42] : memref<2x16x432xbf16, #tpu.memory_space<vmem>>, vector<1x16x384xbf16>
    %46 = vector.shape_cast %45 : vector<1x16x384xbf16> to vector<16x384xbf16>
    %cst_43 = arith.constant dense<0.000000e+00> : vector<1x384xf32>
    %47 = tpu.matmul %44, %46, %cst_43 {dimension_numbers = #tpu.dot_dimension_numbers<[1], [0], [0], [1], [0, 0, 1, 1], [], []>} : vector<1x16xbf16>, vector<16x384xbf16>, vector<1x384xf32> -> vector<1x384xf32>
    %c1_44 = arith.constant 1 : index
    %c0_45 = arith.constant 0 : index
    %48 = vector.load %arg2[%c1_44, %c0_45] : memref<9x16xbf16, #tpu.memory_space<vmem>>, vector<1x16xbf16>
    %c1_46 = arith.constant 1 : index
    %c0_47 = arith.constant 0 : index
    %c1_48 = arith.constant 1 : index
    %49 = vector.load %arg1[%c1_46, %c0_47, %c1_48] : memref<2x16x432xbf16, #tpu.memory_space<vmem>>, vector<1x16x384xbf16>
    %50 = vector.shape_cast %49 : vector<1x16x384xbf16> to vector<16x384xbf16>
    %cst_49 = arith.constant dense<0.000000e+00> : vector<1x384xf32>
    %51 = tpu.matmul %48, %50, %cst_49 {dimension_numbers = #tpu.dot_dimension_numbers<[1], [0], [0], [1], [0, 0, 1, 1], [], []>} : vector<1x16xbf16>, vector<16x384xbf16>, vector<1x384xf32> -> vector<1x384xf32>
    %52 = arith.addf %47, %51 : vector<1x384xf32>
    %c2_50 = arith.constant 2 : index
    %c0_51 = arith.constant 0 : index
    %53 = vector.load %arg2[%c2_50, %c0_51] : memref<9x16xbf16, #tpu.memory_space<vmem>>, vector<1x16xbf16>
    %c1_52 = arith.constant 1 : index
    %c0_53 = arith.constant 0 : index
    %c2_54 = arith.constant 2 : index
    %54 = vector.load %arg1[%c1_52, %c0_53, %c2_54] : memref<2x16x432xbf16, #tpu.memory_space<vmem>>, vector<1x16x384xbf16>
    %55 = vector.shape_cast %54 : vector<1x16x384xbf16> to vector<16x384xbf16>
    %cst_55 = arith.constant dense<0.000000e+00> : vector<1x384xf32>
    %56 = tpu.matmul %53, %55, %cst_55 {dimension_numbers = #tpu.dot_dimension_numbers<[1], [0], [0], [1], [0, 0, 1, 1], [], []>} : vector<1x16xbf16>, vector<16x384xbf16>, vector<1x384xf32> -> vector<1x384xf32>
    %57 = arith.addf %52, %56 : vector<1x384xf32>
    %c3_56 = arith.constant 3 : index
    %c0_57 = arith.constant 0 : index
    %58 = vector.load %arg2[%c3_56, %c0_57] : memref<9x16xbf16, #tpu.memory_space<vmem>>, vector<1x16xbf16>
    %c1_58 = arith.constant 1 : index
    %c0_59 = arith.constant 0 : index
    %c18_60 = arith.constant 18 : index
    %59 = vector.load %arg1[%c1_58, %c0_59, %c18_60] : memref<2x16x432xbf16, #tpu.memory_space<vmem>>, vector<1x16x384xbf16>
    %60 = vector.shape_cast %59 : vector<1x16x384xbf16> to vector<16x384xbf16>
    %cst_61 = arith.constant dense<0.000000e+00> : vector<1x384xf32>
    %61 = tpu.matmul %58, %60, %cst_61 {dimension_numbers = #tpu.dot_dimension_numbers<[1], [0], [0], [1], [0, 0, 1, 1], [], []>} : vector<1x16xbf16>, vector<16x384xbf16>, vector<1x384xf32> -> vector<1x384xf32>
    %62 = arith.addf %57, %61 : vector<1x384xf32>
    %c4_62 = arith.constant 4 : index
    %c0_63 = arith.constant 0 : index
    %63 = vector.load %arg2[%c4_62, %c0_63] : memref<9x16xbf16, #tpu.memory_space<vmem>>, vector<1x16xbf16>
    %c1_64 = arith.constant 1 : index
    %c0_65 = arith.constant 0 : index
    %c19_66 = arith.constant 19 : index
    %64 = vector.load %arg1[%c1_64, %c0_65, %c19_66] : memref<2x16x432xbf16, #tpu.memory_space<vmem>>, vector<1x16x384xbf16>
    %65 = vector.shape_cast %64 : vector<1x16x384xbf16> to vector<16x384xbf16>
    %cst_67 = arith.constant dense<0.000000e+00> : vector<1x384xf32>
    %66 = tpu.matmul %63, %65, %cst_67 {dimension_numbers = #tpu.dot_dimension_numbers<[1], [0], [0], [1], [0, 0, 1, 1], [], []>} : vector<1x16xbf16>, vector<16x384xbf16>, vector<1x384xf32> -> vector<1x384xf32>
    %67 = arith.addf %62, %66 : vector<1x384xf32>
    %c5_68 = arith.constant 5 : index
    %c0_69 = arith.constant 0 : index
    %68 = vector.load %arg2[%c5_68, %c0_69] : memref<9x16xbf16, #tpu.memory_space<vmem>>, vector<1x16xbf16>
    %c1_70 = arith.constant 1 : index
    %c0_71 = arith.constant 0 : index
    %c20_72 = arith.constant 20 : index
    %69 = vector.load %arg1[%c1_70, %c0_71, %c20_72] : memref<2x16x432xbf16, #tpu.memory_space<vmem>>, vector<1x16x384xbf16>
    %70 = vector.shape_cast %69 : vector<1x16x384xbf16> to vector<16x384xbf16>
    %cst_73 = arith.constant dense<0.000000e+00> : vector<1x384xf32>
    %71 = tpu.matmul %68, %70, %cst_73 {dimension_numbers = #tpu.dot_dimension_numbers<[1], [0], [0], [1], [0, 0, 1, 1], [], []>} : vector<1x16xbf16>, vector<16x384xbf16>, vector<1x384xf32> -> vector<1x384xf32>
    %72 = arith.addf %67, %71 : vector<1x384xf32>
    %c6_74 = arith.constant 6 : index
    %c0_75 = arith.constant 0 : index
    %73 = vector.load %arg2[%c6_74, %c0_75] : memref<9x16xbf16, #tpu.memory_space<vmem>>, vector<1x16xbf16>
    %c1_76 = arith.constant 1 : index
    %c0_77 = arith.constant 0 : index
    %c36_78 = arith.constant 36 : index
    %74 = vector.load %arg1[%c1_76, %c0_77, %c36_78] : memref<2x16x432xbf16, #tpu.memory_space<vmem>>, vector<1x16x384xbf16>
    %75 = vector.shape_cast %74 : vector<1x16x384xbf16> to vector<16x384xbf16>
    %cst_79 = arith.constant dense<0.000000e+00> : vector<1x384xf32>
    %76 = tpu.matmul %73, %75, %cst_79 {dimension_numbers = #tpu.dot_dimension_numbers<[1], [0], [0], [1], [0, 0, 1, 1], [], []>} : vector<1x16xbf16>, vector<16x384xbf16>, vector<1x384xf32> -> vector<1x384xf32>
    %77 = arith.addf %72, %76 : vector<1x384xf32>
    %c7_80 = arith.constant 7 : index
    %c0_81 = arith.constant 0 : index
    %78 = vector.load %arg2[%c7_80, %c0_81] : memref<9x16xbf16, #tpu.memory_space<vmem>>, vector<1x16xbf16>
    %c1_82 = arith.constant 1 : index
    %c0_83 = arith.constant 0 : index
    %c37_84 = arith.constant 37 : index
    %79 = vector.load %arg1[%c1_82, %c0_83, %c37_84] : memref<2x16x432xbf16, #tpu.memory_space<vmem>>, vector<1x16x384xbf16>
    %80 = vector.shape_cast %79 : vector<1x16x384xbf16> to vector<16x384xbf16>
    %cst_85 = arith.constant dense<0.000000e+00> : vector<1x384xf32>
    %81 = tpu.matmul %78, %80, %cst_85 {dimension_numbers = #tpu.dot_dimension_numbers<[1], [0], [0], [1], [0, 0, 1, 1], [], []>} : vector<1x16xbf16>, vector<16x384xbf16>, vector<1x384xf32> -> vector<1x384xf32>
    %82 = arith.addf %77, %81 : vector<1x384xf32>
    %c8_86 = arith.constant 8 : index
    %c0_87 = arith.constant 0 : index
    %83 = vector.load %arg2[%c8_86, %c0_87] : memref<9x16xbf16, #tpu.memory_space<vmem>>, vector<1x16xbf16>
    %c1_88 = arith.constant 1 : index
    %c0_89 = arith.constant 0 : index
    %c38_90 = arith.constant 38 : index
    %84 = vector.load %arg1[%c1_88, %c0_89, %c38_90] : memref<2x16x432xbf16, #tpu.memory_space<vmem>>, vector<1x16x384xbf16>
    %85 = vector.shape_cast %84 : vector<1x16x384xbf16> to vector<16x384xbf16>
    %cst_91 = arith.constant dense<0.000000e+00> : vector<1x384xf32>
    %86 = tpu.matmul %83, %85, %cst_91 {dimension_numbers = #tpu.dot_dimension_numbers<[1], [0], [0], [1], [0, 0, 1, 1], [], []>} : vector<1x16xbf16>, vector<16x384xbf16>, vector<1x384xf32> -> vector<1x384xf32>
    %87 = arith.addf %82, %86 : vector<1x384xf32>
    %88 = tpu.concatenate %43, %87 in 0 : vector<1x384xf32>, vector<1x384xf32> -> vector<2x384xf32>
    %cst_92 = arith.constant 0.000000e+00 : f32
    %89 = vector.broadcast %cst_92 : f32 to vector<2x384xf32>
    %90 = arith.subf %89, %88 : vector<2x384xf32>
    %91 = math.exp %90 : vector<2x384xf32>
    %cst_93 = arith.constant 1.000000e+00 : f32
    %92 = vector.broadcast %cst_93 : f32 to vector<2x384xf32>
    %93 = arith.addf %92, %91 : vector<2x384xf32>
    %94 = tpu.reciprocal %93 {approx = true} : vector<2x384xf32> -> vector<2x384xf32>
    %c0_94 = arith.constant 0 : index
    %c0_95 = arith.constant 0 : index
    %95 = vector.load %arg3[%c0_94, %c0_95] : memref<2x384xf32, #tpu.memory_space<vmem>>, vector<2x384xf32>
    tpu.vector_store %arg3[%c0_94, %c0_95], %94 {strides = array<i32>} : memref<2x384xf32, #tpu.memory_space<vmem>>, vector<2x384xf32>,
    return
  }
  func.func @transform_0(%arg0: i32) -> (i32, i32, i32) {
    %c0_i32 = arith.constant 0 : i32
    %c0_i32_0 = arith.constant 0 : i32
    %c0_i32_1 = arith.constant 0 : i32
    return %arg0, %c0_i32, %c0_i32_0 : i32, i32, i32
  }
  func.func @transform_1(%arg0: i32) -> (i32, i32) {
    %c0_i32 = arith.constant 0 : i32
    %c0_i32_0 = arith.constant 0 : i32
    %c0_i32_1 = arith.constant 0 : i32
    return %c0_i32, %c0_i32_0 : i32, i32
  }
  func.func @transform_2(%arg0: i32) -> (i32, i32) {
    %c0_i32 = arith.constant 0 : i32
    %c0_i32_0 = arith.constant 0 : i32
    return %arg0, %c0_i32 : i32, i32
  }
}

</mosaic_0001>

<llo_original>
// kernel: tpu_custom_call.1
$region0: #{tpu_custom_call.1}
  #allocation0 [shape = 'u32[]', space=smem, size = 0x4, offset = 0x4, fixed_abs, tag = 'smem constant byte address 0x4 - core index']
  #allocation1 [shape = 'u32[144,128]{1,0:T(1,128)}', space=vmem, size = 0x12000, scoped, tag = 'internal scratch']
  %s0 = inlined_call_operand.hbm [shape: bf16[2,16,432], index: 0, kind: input, shape index: {}]
  %s1 = inlined_call_operand.hbm [shape: bf16[9,16], index: 1, kind: input, shape index: {}]
  %s2 = inlined_call_operand.hbm [shape: f32[2,384], index: 2, kind: output, shape index: {}]
  %s3 = sld [smem:[#allocation0]]
  $region26: #{tpu_custom_call.1} parent=0
    _
  %s5 = ssub.s32 1, %s3
  %s6 = scalar_select 0, %s5, %s3
  $region1: #{tpu_custom_call.1} parent=0
    #allocation2 [shape = 'u8[32768]{0}', space=vmem, size = 0x8000, scoped, tag = 'input window, operand 0, single buffered']
    #allocation3 [shape = 's32[1]{0}', space=sflag, size = 0x4, scoped, tag = 'scoped memory for tpu_custom_call.1']
    #allocation4 [shape = 's32[1]{0}', space=sflag, size = 0x4, scoped, tag = 'scoped memory for tpu_custom_call.1']
    #allocation5 [shape = 'u8[4096]{0}', space=vmem, size = 0x1000, scoped, tag = 'input window, operand 1, single buffered']
    #allocation6 [shape = 's32[1]{0}', space=sflag, size = 0x4, scoped, tag = 'scoped memory for tpu_custom_call.1']
    #allocation7 [shape = 'u8[3072]{0}', space=vmem, size = 0xc00, scoped, tag = 'output window, operand 0, single buffered']
    %7 = vsyncpa [#allocation3], 0
    %8 = vsyncpa [#allocation6], 0
    %9 = vsyncpa [#allocation4], 0
    // Predicated region
    $region2: #{tpu_custom_call.1} parent=1 // pred_check
      _
    $region3: #{tpu_custom_call.1} parent=1 // pred_check_branch
      %11 = sbr.rel (0) target = $region5
    $region4: #{tpu_custom_call.1} parent=1 // pred_region
      %s13 = ssub.s32 1024, 1024
      %14 = vsyncadd [#allocation3], %s13
      %s15 = sshll.u32 [#allocation2], 4
      %s16 = int_to_ptr.vmem [resolvable:$true] %s15
      %21 = dma.hbm_to_vmem [thread:$0]  %s0, 1024, %s16, [#allocation3], 256, 256, 16
    $region5: #{tpu_custom_call.1} parent=1 // pred_fallthru
      _
    // Predicated region
    $region6: #{tpu_custom_call.1} parent=1 // pred_check
      _
    $region7: #{tpu_custom_call.1} parent=1 // pred_check_branch
      %23 = sbr.rel (0) target = $region9
    $region8: #{tpu_custom_call.1} parent=1 // pred_region
      %s25 = ssub.s32 128, 128
      %26 = vsyncadd [#allocation6], %s25
      %s27 = sshll.u32 [#allocation5], 4
      %s28 = int_to_ptr.vmem [resolvable:$true] %s27
      %33 = dma.hbm_to_vmem [thread:$0]  %s1, 128, %s28, [#allocation6], 64, 64, 4
    $region9: #{tpu_custom_call.1} parent=1 // pred_fallthru
      _
    // Predicated region
    $region10: #{tpu_custom_call.1} parent=1 // pred_check
      _
    $region11: #{tpu_custom_call.1} parent=1 // pred_check_branch
      %35 = sbr.rel (0) target = $region13
    $region12: #{tpu_custom_call.1} parent=1 // pred_region
      %36 = dma.done [#allocation3], 1024
    $region13: #{tpu_custom_call.1} parent=1 // pred_fallthru
      _
    // Predicated region
    $region14: #{tpu_custom_call.1} parent=1 // pred_check
      _
    $region15: #{tpu_custom_call.1} parent=1 // pred_check_branch
      %38 = sbr.rel (0) target = $region17
    $region16: #{tpu_custom_call.1} parent=1 // pred_region
      %39 = dma.done [#allocation6], 128
    $region17: #{tpu_custom_call.1} parent=1 // pred_fallthru
      _
    %v41 = vld [vmem:[#allocation5] sm:$0x1]
    %v42 = vld [vmem:[#allocation2] sm:$0xff]
    %v43 = vld [vmem:[#allocation2 + $0x8] sm:$0xf]
    %v44 = vld [vmem:[#allocation2 + $0x10] sm:$0xff]
    %v45 = vld [vmem:[#allocation2 + $0x18] sm:$0xf]
    %v46 = vld [vmem:[#allocation2 + $0x8] sm:$0xff]
    %v47 = vld [vmem:[#allocation2 + $0x18] sm:$0xff]
    %v49 = vunpack.c.l.b16 %v41
    %v50 = vpack.c.b16 %v49, %v49
    %v52 = vshrl.u32 %v50, 16
    %v58 = vunpack.c.l.b16 %v42
    %v59 = vunpack.c.h.b16 %v42
    %v60 = vunpack.c.l.b16 %v46
    %v61 = vunpack.c.h.b16 %v46
    %v62 = vunpack.c.l.b16 %v44
    %v63 = vunpack.c.h.b16 %v44
    %v64 = vunpack.c.l.b16 %v47
    %v65 = vunpack.c.h.b16 %v47
    %v66 = vpack.c.b16 %v62, %v58
    %v67 = vpack.c.b16 %v63, %v59
    %v68 = vpack.c.b16 %v64, %v60
    %v69 = vpack.c.b16 %v65, %v61
    %70 = vrot.lane.b32.xlu0 %v66, 127
    %v71 = vpop.permute.xlu0 %70
    %72 = vrot.lane.b32.xlu0 %v67, 127
    %v73 = vpop.permute.xlu0 %72
    %74 = vrot.lane.b32.xlu0 %v68, 127
    %v75 = vpop.permute.xlu0 %74
    %76 = vrot.lane.b32.xlu0 %v69, 127
    %v77 = vpop.permute.xlu0 %76
    %vm78 = vcmask 1039360
    %v79 = vsel %vm78, %v71, %v73
    %v80 = vsel %vm78, %v73, %v75
    %v81 = vsel %vm78, %v75, %v77
    %vm85 = vcmask 130048
    %v87 = vsel %vm85, %v52, 0
    %89 = vmatprep.subr.bf16.mxu0 %v80
    %90 = vmatpush1.bf16.msra.mxu0 %v79
    %91 = vmatprep.subr.bf16.mxu0 0
    %92 = vmatpush1.bf16.msra.mxu0 0
    %93 = vmatprep.subr.bf16.mxu0 0
    %94 = vmatpush1.bf16.msra.mxu0 0
    %95 = vmatprep.subr.bf16.mxu0 0
    %96 = vmatpush1.bf16.msra.mxu0 0
    %97 = vmatprep.subr.bf16.mxu0 0
    %98 = vmatpush1.bf16.msra.mxu0 0
    %99 = vmatprep.subr.bf16.mxu0 0
    %100 = vmatpush1.bf16.msra.mxu0 0
    %101 = vmatprep.subr.bf16.mxu0 0
    %102 = vmatpush1.bf16.msra.mxu0 0
    %103 = vmatprep.subr.bf16.mxu0 0
    %104 = vmatpush1.bf16.msra.mxu0 0
    %105 = vmatprep.subr.bf16.mxu0 0
    %106 = vmatpush1.bf16.msra.mxu0 0
    %107 = vmatprep.subr.bf16.mxu0 0
    %108 = vmatpush1.bf16.msra.mxu0 0
    %109 = vmatprep.subr.bf16.mxu0 0
    %110 = vmatpush1.bf16.msra.mxu0 0
    %111 = vmatprep.subr.bf16.mxu0 0
    %112 = vmatpush1.bf16.msra.mxu0 0
    %113 = vmatprep.subr.bf16.mxu0 0
    %114 = vmatpush1.bf16.msra.mxu0 0
    %115 = vmatprep.subr.bf16.mxu0 0
    %116 = vmatpush1.bf16.msra.mxu0 0
    %117 = vmatprep.subr.bf16.mxu0 0
    %118 = vmatpush1.bf16.msra.mxu0 0
    %119 = vmatprep.subr.bf16.mxu0 0
    %120 = vmatpush1.bf16.msra.mxu0 0
    %121 = vmatprep.mubr.bf16.mxu0 0
    %122 = vmatmul.mubr.bf16.gmra.mrb[0].mxu0 %v87
    %v123 = vpop.f32.mrb[0].mxu0
    %v124 = vadd.f32 0.0, %v123
    %v125 = vpop.f32.mrb[0].mxu0
    %v126 = vadd.f32 0.0, %v125
    %v127 = vpop.f32.mrb[0].mxu0
    %v128 = vpop.f32.mrb[0].mxu0
    %129 = vdwg.mxu0
    %130 = vmatprep.subr.bf16.mxu0 0
    %131 = vmatpush1.bf16.msra.mxu0 %v81
    %132 = vmatprep.subr.bf16.mxu0 0
    %133 = vmatpush1.bf16.msra.mxu0 0
    %134 = vmatprep.subr.bf16.mxu0 0
    %135 = vmatpush1.bf16.msra.mxu0 0
    %136 = vmatprep.subr.bf16.mxu0 0
    %137 = vmatpush1.bf16.msra.mxu0 0
    %138 = vmatprep.subr.bf16.mxu0 0
    %139 = vmatpush1.bf16.msra.mxu0 0
    %140 = vmatprep.subr.bf16.mxu0 0
    %141 = vmatpush1.bf16.msra.mxu0 0
    %142 = vmatprep.subr.bf16.mxu0 0
    %143 = vmatpush1.bf16.msra.mxu0 0
    %144 = vmatprep.subr.bf16.mxu0 0
    %145 = vmatpush1.bf16.msra.mxu0 0
    %146 = vmatprep.subr.bf16.mxu0 0
    %147 = vmatpush1.bf16.msra.mxu0 0
    %148 = vmatprep.subr.bf16.mxu0 0
    %149 = vmatpush1.bf16.msra.mxu0 0
    %150 = vmatprep.subr.bf16.mxu0 0
    %151 = vmatpush1.bf16.msra.mxu0 0
    %152 = vmatprep.subr.bf16.mxu0 0
    %153 = vmatpush1.bf16.msra.mxu0 0
    %154 = vmatprep.subr.bf16.mxu0 0
    %155 = vmatpush1.bf16.msra.mxu0 0
    %156 = vmatprep.subr.bf16.mxu0 0
    %157 = vmatpush1.bf16.msra.mxu0 0
    %158 = vmatprep.subr.bf16.mxu0 0
    %159 = vmatpush1.bf16.msra.mxu0 0
    %160 = vmatprep.subr.bf16.mxu0 0
    %161 = vmatpush1.bf16.msra.mxu0 0
    %162 = vmatprep.mubr.bf16.mxu0 0
    %163 = vmatmul.mubr.bf16.gmra.mrb[0].mxu0 %v87
    %v164 = vpop.f32.mrb[0].mxu0
    %v165 = vadd.f32 0.0, %v164
    %v166 = vpop.f32.mrb[0].mxu0
    %v167 = vpop.f32.mrb[0].mxu0
    %v168 = vpop.f32.mrb[0].mxu0
    %169 = vdwg.mxu0
    %v172 = vunpack.c.l.b16 %v43
    %v173 = vunpack.c.l.b16 %v45
    %v174 = vpack.c.b16 %v173, %v172
    %v179 = vsel %vm85, %v41, 0
    %181 = vmatprep.subr.bf16.mxu0 %v67
    %182 = vmatpush1.bf16.msra.mxu0 %v66
    %183 = vmatprep.subr.bf16.mxu0 0
    %184 = vmatpush1.bf16.msra.mxu0 0
    %185 = vmatprep.subr.bf16.mxu0 0
    %186 = vmatpush1.bf16.msra.mxu0 0
    %187 = vmatprep.subr.bf16.mxu0 0
    %188 = vmatpush1.bf16.msra.mxu0 0
    %189 = vmatprep.subr.bf16.mxu0 0
    %190 = vmatpush1.bf16.msra.mxu0 0
    %191 = vmatprep.subr.bf16.mxu0 0
    %192 = vmatpush1.bf16.msra.mxu0 0
    %193 = vmatprep.subr.bf16.mxu0 0
    %194 = vmatpush1.bf16.msra.mxu0 0
    %195 = vmatprep.subr.bf16.mxu0 0
    %196 = vmatpush1.bf16.msra.mxu0 0
    %197 = vmatprep.subr.bf16.mxu0 0
    %198 = vmatpush1.bf16.msra.mxu0 0
    %199 = vmatprep.subr.bf16.mxu0 0
    %200 = vmatpush1.bf16.msra.mxu0 0
    %201 = vmatprep.subr.bf16.mxu0 0
    %202 = vmatpush1.bf16.msra.mxu0 0
    %203 = vmatprep.subr.bf16.mxu0 0
    %204 = vmatpush1.bf16.msra.mxu0 0
    %205 = vmatprep.subr.bf16.mxu0 0
    %206 = vmatpush1.bf16.msra.mxu0 0
    %207 = vmatprep.subr.bf16.mxu0 0
    %208 = vmatpush1.bf16.msra.mxu0 0
    %209 = vmatprep.subr.bf16.mxu0 0
    %210 = vmatpush1.bf16.msra.mxu0 0
    %211 = vmatprep.subr.bf16.mxu0 0
    %212 = vmatpush1.bf16.msra.mxu0 0
    %213 = vmatprep.mubr.bf16.mxu0 0
    %214 = vmatmul.mubr.bf16.gmra.mrb[0].mxu0 %v179
    %v215 = vpop.f32.mrb[0].mxu0
    %v216 = vadd.f32 %v124, %v215
    %v217 = vpop.f32.mrb[0].mxu0
    %v218 = vadd.f32 %v126, %v217
    %v219 = vpop.f32.mrb[0].mxu0
    %v220 = vpop.f32.mrb[0].mxu0
    %221 = vdwg.mxu0
    %222 = vmatprep.subr.bf16.mxu0 0
    %223 = vmatpush1.bf16.msra.mxu0 %v174
    %224 = vmatprep.subr.bf16.mxu0 0
    %225 = vmatpush1.bf16.msra.mxu0 0
    %226 = vmatprep.subr.bf16.mxu0 0
    %227 = vmatpush1.bf16.msra.mxu0 0
    %228 = vmatprep.subr.bf16.mxu0 0
    %229 = vmatpush1.bf16.msra.mxu0 0
    %230 = vmatprep.subr.bf16.mxu0 0
    %231 = vmatpush1.bf16.msra.mxu0 0
    %232 = vmatprep.subr.bf16.mxu0 0
    %233 = vmatpush1.bf16.msra.mxu0 0
    %234 = vmatprep.subr.bf16.mxu0 0
    %235 = vmatpush1.bf16.msra.mxu0 0
    %236 = vmatprep.subr.bf16.mxu0 0
    %237 = vmatpush1.bf16.msra.mxu0 0
    %238 = vmatprep.subr.bf16.mxu0 0
    %239 = vmatpush1.bf16.msra.mxu0 0
    %240 = vmatprep.subr.bf16.mxu0 0
    %241 = vmatpush1.bf16.msra.mxu0 0
    %242 = vmatprep.subr.bf16.mxu0 0
    %243 = vmatpush1.bf16.msra.mxu0 0
    %244 = vmatprep.subr.bf16.mxu0 0
    %245 = vmatpush1.bf16.msra.mxu0 0
    %246 = vmatprep.subr.bf16.mxu0 0
    %247 = vmatpush1.bf16.msra.mxu0 0
    %248 = vmatprep.subr.bf16.mxu0 0
    %249 = vmatpush1.bf16.msra.mxu0 0
    %250 = vmatprep.subr.bf16.mxu0 0
    %251 = vmatpush1.bf16.msra.mxu0 0
    %252 = vmatprep.subr.bf16.mxu0 0
    %253 = vmatpush1.bf16.msra.mxu0 0
    %254 = vmatprep.mubr.bf16.mxu0 0
    %255 = vmatmul.mubr.bf16.gmra.mrb[0].mxu0 %v179
    %v256 = vpop.f32.mrb[0].mxu0
    %v257 = vadd.f32 %v165, %v256
    %v258 = vpop.f32.mrb[0].mxu0
    %v259 = vpop.f32.mrb[0].mxu0
    %v260 = vpop.f32.mrb[0].mxu0
    %261 = vdwg.mxu0
    %v262 = vld [vmem:[#allocation5] sm:$0x2]
    %v264 = vunpack.c.l.b16 %v262
    %v265 = vpack.c.b16 %v264, %v264
    %v266 = vrot.slane %v265, 1
    %267 = vrot.lane.b32.xlu0 %v66, 126
    %v268 = vpop.permute.xlu0 %267
    %269 = vrot.lane.b32.xlu0 %v67, 126
    %v270 = vpop.permute.xlu0 %269
    %271 = vrot.lane.b32.xlu0 %v68, 126
    %v272 = vpop.permute.xlu0 %271
    %273 = vrot.lane.b32.xlu0 %v69, 126
    %v274 = vpop.permute.xlu0 %273
    %vm275 = vcmask 1031168
    %v276 = vsel %vm275, %v268, %v270
    %v277 = vsel %vm275, %v270, %v272
    %v278 = vsel %vm275, %v272, %v274
    %v283 = vsel %vm85, %v266, 0
    %285 = vmatprep.subr.bf16.mxu0 %v277
    %286 = vmatpush1.bf16.msra.mxu0 %v276
    %287 = vmatprep.subr.bf16.mxu0 0
    %288 = vmatpush1.bf16.msra.mxu0 0
    %289 = vmatprep.subr.bf16.mxu0 0
    %290 = vmatpush1.bf16.msra.mxu0 0
    %291 = vmatprep.subr.bf16.mxu0 0
    %292 = vmatpush1.bf16.msra.mxu0 0
    %293 = vmatprep.subr.bf16.mxu0 0
    %294 = vmatpush1.bf16.msra.mxu0 0
    %295 = vmatprep.subr.bf16.mxu0 0
    %296 = vmatpush1.bf16.msra.mxu0 0
    %297 = vmatprep.subr.bf16.mxu0 0
    %298 = vmatpush1.bf16.msra.mxu0 0
    %299 = vmatprep.subr.bf16.mxu0 0
    %300 = vmatpush1.bf16.msra.mxu0 0
    %301 = vmatprep.subr.bf16.mxu0 0
    %302 = vmatpush1.bf16.msra.mxu0 0
    %303 = vmatprep.subr.bf16.mxu0 0
    %304 = vmatpush1.bf16.msra.mxu0 0
    %305 = vmatprep.subr.bf16.mxu0 0
    %306 = vmatpush1.bf16.msra.mxu0 0
    %307 = vmatprep.subr.bf16.mxu0 0
    %308 = vmatpush1.bf16.msra.mxu0 0
    %309 = vmatprep.subr.bf16.mxu0 0
    %310 = vmatpush1.bf16.msra.mxu0 0
    %311 = vmatprep.subr.bf16.mxu0 0
    %312 = vmatpush1.bf16.msra.mxu0 0
    %313 = vmatprep.subr.bf16.mxu0 0
    %314 = vmatpush1.bf16.msra.mxu0 0
    %315 = vmatprep.subr.bf16.mxu0 0
    %316 = vmatpush1.bf16.msra.mxu0 0
    %317 = vmatprep.mubr.bf16.mxu0 0
    %318 = vmatmul.mubr.bf16.gmra.mrb[0].mxu0 %v283
    %v319 = vpop.f32.mrb[0].mxu0
    %v320 = vadd.f32 0.0, %v319
    %v321 = vpop.f32.mrb[0].mxu0
    %v322 = vadd.f32 0.0, %v321
    %v323 = vpop.f32.mrb[0].mxu0
    %v324 = vpop.f32.mrb[0].mxu0
    %325 = vdwg.mxu0
    %326 = vmatprep.subr.bf16.mxu0 0
    %327 = vmatpush1.bf16.msra.mxu0 %v278
    %328 = vmatprep.subr.bf16.mxu0 0
    %329 = vmatpush1.bf16.msra.mxu0 0
    %330 = vmatprep.subr.bf16.mxu0 0
    %331 = vmatpush1.bf16.msra.mxu0 0
    %332 = vmatprep.subr.bf16.mxu0 0
    %333 = vmatpush1.bf16.msra.mxu0 0
    %334 = vmatprep.subr.bf16.mxu0 0
    %335 = vmatpush1.bf16.msra.mxu0 0
    %336 = vmatprep.subr.bf16.mxu0 0
    %337 = vmatpush1.bf16.msra.mxu0 0
    %338 = vmatprep.subr.bf16.mxu0 0
    %339 = vmatpush1.bf16.msra.mxu0 0
    %340 = vmatprep.subr.bf16.mxu0 0
    %341 = vmatpush1.bf16.msra.mxu0 0
    %342 = vmatprep.subr.bf16.mxu0 0
    %343 = vmatpush1.bf16.msra.mxu0 0
    %344 = vmatprep.subr.bf16.mxu0 0
    %345 = vmatpush1.bf16.msra.mxu0 0
    %346 = vmatprep.subr.bf16.mxu0 0
    %347 = vmatpush1.bf16.msra.mxu0 0
    %348 = vmatprep.subr.bf16.mxu0 0
    %349 = vmatpush1.bf16.msra.mxu0 0
    %350 = vmatprep.subr.bf16.mxu0 0
    %351 = vmatpush1.bf16.msra.mxu0 0
    %352 = vmatprep.subr.bf16.mxu0 0
    %353 = vmatpush1.bf16.msra.mxu0 0
    %354 = vmatprep.subr.bf16.mxu0 0
    %355 = vmatpush1.bf16.msra.mxu0 0
    %356 = vmatprep.subr.bf16.mxu0 0
    %357 = vmatpush1.bf16.msra.mxu0 0
    %358 = vmatprep.mubr.bf16.mxu0 0
    %359 = vmatmul.mubr.bf16.gmra.mrb[0].mxu0 %v283
    %v360 = vpop.f32.mrb[0].mxu0
    %v361 = vadd.f32 0.0, %v360
    %v362 = vpop.f32.mrb[0].mxu0
    %v363 = vpop.f32.mrb[0].mxu0
    %v364 = vpop.f32.mrb[0].mxu0
    %365 = vdwg.mxu0
    %v366 = vadd.f32 %v216, %v320
    %v367 = vadd.f32 %v218, %v322
    %v368 = vadd.f32 %v257, %v361
    %v370 = vshrl.u32 %v265, 16
    %v372 = vrot.slane %v370, 1
    %373 = vrot.lane.b32.xlu0 %v66, 110
    %v374 = vpop.permute.xlu0 %373
    %375 = vrot.lane.b32.xlu0 %v67, 110
    %v376 = vpop.permute.xlu0 %375
    %377 = vrot.lane.b32.xlu0 %v68, 110
    %v378 = vpop.permute.xlu0 %377
    %379 = vrot.lane.b32.xlu0 %v69, 110
    %v380 = vpop.permute.xlu0 %379
    %vm381 = vcmask 900096
    %v382 = vsel %vm381, %v374, %v376
    %v383 = vsel %vm381, %v376, %v378
    %v384 = vsel %vm381, %v378, %v380
    %v389 = vsel %vm85, %v372, 0
    %391 = vmatprep.subr.bf16.mxu0 %v383
    %392 = vmatpush1.bf16.msra.mxu0 %v382
    %393 = vmatprep.subr.bf16.mxu0 0
    %394 = vmatpush1.bf16.msra.mxu0 0
    %395 = vmatprep.subr.bf16.mxu0 0
    %396 = vmatpush1.bf16.msra.mxu0 0
    %397 = vmatprep.subr.bf16.mxu0 0
    %398 = vmatpush1.bf16.msra.mxu0 0
    %399 = vmatprep.subr.bf16.mxu0 0
    %400 = vmatpush1.bf16.msra.mxu0 0
    %401 = vmatprep.subr.bf16.mxu0 0
    %402 = vmatpush1.bf16.msra.mxu0 0
    %403 = vmatprep.subr.bf16.mxu0 0
    %404 = vmatpush1.bf16.msra.mxu0 0
    %405 = vmatprep.subr.bf16.mxu0 0
    %406 = vmatpush1.bf16.msra.mxu0 0
    %407 = vmatprep.subr.bf16.mxu0 0
    %408 = vmatpush1.bf16.msra.mxu0 0
    %409 = vmatprep.subr.bf16.mxu0 0
    %410 = vmatpush1.bf16.msra.mxu0 0
    %411 = vmatprep.subr.bf16.mxu0 0
    %412 = vmatpush1.bf16.msra.mxu0 0
    %413 = vmatprep.subr.bf16.mxu0 0
    %414 = vmatpush1.bf16.msra.mxu0 0
    %415 = vmatprep.subr.bf16.mxu0 0
    %416 = vmatpush1.bf16.msra.mxu0 0
    %417 = vmatprep.subr.bf16.mxu0 0
    %418 = vmatpush1.bf16.msra.mxu0 0
    %419 = vmatprep.subr.bf16.mxu0 0
    %420 = vmatpush1.bf16.msra.mxu0 0
    %421 = vmatprep.subr.bf16.mxu0 0
    %422 = vmatpush1.bf16.msra.mxu0 0
    %423 = vmatprep.mubr.bf16.mxu0 0
    %424 = vmatmul.mubr.bf16.gmra.mrb[0].mxu0 %v389
    %v425 = vpop.f32.mrb[0].mxu0
    %v426 = vadd.f32 0.0, %v425
    %v427 = vpop.f32.mrb[0].mxu0
    %v428 = vadd.f32 0.0, %v427
    %v429 = vpop.f32.mrb[0].mxu0
    %v430 = vpop.f32.mrb[0].mxu0
    %431 = vdwg.mxu0
    %432 = vmatprep.subr.bf16.mxu0 0
    %433 = vmatpush1.bf16.msra.mxu0 %v384
    %434 = vmatprep.subr.bf16.mxu0 0
    %435 = vmatpush1.bf16.msra.mxu0 0
    %436 = vmatprep.subr.bf16.mxu0 0
    %437 = vmatpush1.bf16.msra.mxu0 0
    %438 = vmatprep.subr.bf16.mxu0 0
    %439 = vmatpush1.bf16.msra.mxu0 0
    %440 = vmatprep.subr.bf16.mxu0 0
    %441 = vmatpush1.bf16.msra.mxu0 0
    %442 = vmatprep.subr.bf16.mxu0 0
    %443 = vmatpush1.bf16.msra.mxu0 0
    %444 = vmatprep.subr.bf16.mxu0 0
    %445 = vmatpush1.bf16.msra.mxu0 0
    %446 = vmatprep.subr.bf16.mxu0 0
    %447 = vmatpush1.bf16.msra.mxu0 0
    %448 = vmatprep.subr.bf16.mxu0 0
    %449 = vmatpush1.bf16.msra.mxu0 0
    %450 = vmatprep.subr.bf16.mxu0 0
    %451 = vmatpush1.bf16.msra.mxu0 0
    %452 = vmatprep.subr.bf16.mxu0 0
    %453 = vmatpush1.bf16.msra.mxu0 0
    %454 = vmatprep.subr.bf16.mxu0 0
    %455 = vmatpush1.bf16.msra.mxu0 0
    %456 = vmatprep.subr.bf16.mxu0 0
    %457 = vmatpush1.bf16.msra.mxu0 0
    %458 = vmatprep.subr.bf16.mxu0 0
    %459 = vmatpush1.bf16.msra.mxu0 0
    %460 = vmatprep.subr.bf16.mxu0 0
    %461 = vmatpush1.bf16.msra.mxu0 0
    %462 = vmatprep.subr.bf16.mxu0 0
    %463 = vmatpush1.bf16.msra.mxu0 0
    %464 = vmatprep.mubr.bf16.mxu0 0
    %465 = vmatmul.mubr.bf16.gmra.mrb[0].mxu0 %v389
    %v466 = vpop.f32.mrb[0].mxu0
    %v467 = vadd.f32 0.0, %v466
    %v468 = vpop.f32.mrb[0].mxu0
    %v469 = vpop.f32.mrb[0].mxu0
    %v470 = vpop.f32.mrb[0].mxu0
    %471 = vdwg.mxu0
    %v472 = vadd.f32 %v366, %v426
    %v473 = vadd.f32 %v367, %v428
    %v474 = vadd.f32 %v368, %v467
    %v475 = vld [vmem:[#allocation5] sm:$0x4]
    %v477 = vunpack.c.l.b16 %v475
    %v478 = vpack.c.b16 %v477, %v477
    %v479 = vrot.slane %v478, 2
    %480 = vrot.lane.b32.xlu0 %v66, 109
    %v481 = vpop.permute.xlu0 %480
    %482 = vrot.lane.b32.xlu0 %v67, 109
    %v483 = vpop.permute.xlu0 %482
    %484 = vrot.lane.b32.xlu0 %v68, 109
    %v485 = vpop.permute.xlu0 %484
    %486 = vrot.lane.b32.xlu0 %v69, 109
    %v487 = vpop.permute.xlu0 %486
    %vm488 = vcmask 891904
    %v489 = vsel %vm488, %v481, %v483
    %v490 = vsel %vm488, %v483, %v485
    %v491 = vsel %vm488, %v485, %v487
    %v496 = vsel %vm85, %v479, 0
    %498 = vmatprep.subr.bf16.mxu0 %v490
    %499 = vmatpush1.bf16.msra.mxu0 %v489
    %500 = vmatprep.subr.bf16.mxu0 0
    %501 = vmatpush1.bf16.msra.mxu0 0
    %502 = vmatprep.subr.bf16.mxu0 0
    %503 = vmatpush1.bf16.msra.mxu0 0
    %504 = vmatprep.subr.bf16.mxu0 0
    %505 = vmatpush1.bf16.msra.mxu0 0
    %506 = vmatprep.subr.bf16.mxu0 0
    %507 = vmatpush1.bf16.msra.mxu0 0
    %508 = vmatprep.subr.bf16.mxu0 0
    %509 = vmatpush1.bf16.msra.mxu0 0
    %510 = vmatprep.subr.bf16.mxu0 0
    %511 = vmatpush1.bf16.msra.mxu0 0
    %512 = vmatprep.subr.bf16.mxu0 0
    %513 = vmatpush1.bf16.msra.mxu0 0
    %514 = vmatprep.subr.bf16.mxu0 0
    %515 = vmatpush1.bf16.msra.mxu0 0
    %516 = vmatprep.subr.bf16.mxu0 0
    %517 = vmatpush1.bf16.msra.mxu0 0
    %518 = vmatprep.subr.bf16.mxu0 0
    %519 = vmatpush1.bf16.msra.mxu0 0
    %520 = vmatprep.subr.bf16.mxu0 0
    %521 = vmatpush1.bf16.msra.mxu0 0
    %522 = vmatprep.subr.bf16.mxu0 0
    %523 = vmatpush1.bf16.msra.mxu0 0
    %524 = vmatprep.subr.bf16.mxu0 0
    %525 = vmatpush1.bf16.msra.mxu0 0
    %526 = vmatprep.subr.bf16.mxu0 0
    %527 = vmatpush1.bf16.msra.mxu0 0
    %528 = vmatprep.subr.bf16.mxu0 0
    %529 = vmatpush1.bf16.msra.mxu0 0
    %530 = vmatprep.mubr.bf16.mxu0 0
    %531 = vmatmul.mubr.bf16.gmra.mrb[0].mxu0 %v496
    %v532 = vpop.f32.mrb[0].mxu0
    %v533 = vadd.f32 0.0, %v532
    %v534 = vpop.f32.mrb[0].mxu0
    %v535 = vadd.f32 0.0, %v534
    %v536 = vpop.f32.mrb[0].mxu0
    %v537 = vpop.f32.mrb[0].mxu0
    %538 = vdwg.mxu0
    %539 = vmatprep.subr.bf16.mxu0 0
    %540 = vmatpush1.bf16.msra.mxu0 %v491
    %541 = vmatprep.subr.bf16.mxu0 0
    %542 = vmatpush1.bf16.msra.mxu0 0
    %543 = vmatprep.subr.bf16.mxu0 0
    %544 = vmatpush1.bf16.msra.mxu0 0
    %545 = vmatprep.subr.bf16.mxu0 0
    %546 = vmatpush1.bf16.msra.mxu0 0
    %547 = vmatprep.subr.bf16.mxu0 0
    %548 = vmatpush1.bf16.msra.mxu0 0
    %549 = vmatprep.subr.bf16.mxu0 0
    %550 = vmatpush1.bf16.msra.mxu0 0
    %551 = vmatprep.subr.bf16.mxu0 0
    %552 = vmatpush1.bf16.msra.mxu0 0
    %553 = vmatprep.subr.bf16.mxu0 0
    %554 = vmatpush1.bf16.msra.mxu0 0
    %555 = vmatprep.subr.bf16.mxu0 0
    %556 = vmatpush1.bf16.msra.mxu0 0
    %557 = vmatprep.subr.bf16.mxu0 0
    %558 = vmatpush1.bf16.msra.mxu0 0
    %559 = vmatprep.subr.bf16.mxu0 0
    %560 = vmatpush1.bf16.msra.mxu0 0
    %561 = vmatprep.subr.bf16.mxu0 0
    %562 = vmatpush1.bf16.msra.mxu0 0
    %563 = vmatprep.subr.bf16.mxu0 0
    %564 = vmatpush1.bf16.msra.mxu0 0
    %565 = vmatprep.subr.bf16.mxu0 0
    %566 = vmatpush1.bf16.msra.mxu0 0
    %567 = vmatprep.subr.bf16.mxu0 0
    %568 = vmatpush1.bf16.msra.mxu0 0
    %569 = vmatprep.subr.bf16.mxu0 0
    %570 = vmatpush1.bf16.msra.mxu0 0
    %571 = vmatprep.mubr.bf16.mxu0 0
    %572 = vmatmul.mubr.bf16.gmra.mrb[0].mxu0 %v496
    %v573 = vpop.f32.mrb[0].mxu0
    %v574 = vadd.f32 0.0, %v573
    %v575 = vpop.f32.mrb[0].mxu0
    %v576 = vpop.f32.mrb[0].mxu0
    %v577 = vpop.f32.mrb[0].mxu0
    %578 = vdwg.mxu0
    %v579 = vadd.f32 %v472, %v533
    %v580 = vadd.f32 %v473, %v535
    %v581 = vadd.f32 %v474, %v574
    %v583 = vshrl.u32 %v478, 16
    %v585 = vrot.slane %v583, 2
    %586 = vrot.lane.b32.xlu0 %v66, 108
    %v587 = vpop.permute.xlu0 %586
    %588 = vrot.lane.b32.xlu0 %v67, 108
    %v589 = vpop.permute.xlu0 %588
    %590 = vrot.lane.b32.xlu0 %v68, 108
    %v591 = vpop.permute.xlu0 %590
    %592 = vrot.lane.b32.xlu0 %v69, 108
    %v593 = vpop.permute.xlu0 %592
    %vm594 = vcmask 883712
    %v595 = vsel %vm594, %v587, %v589
    %v596 = vsel %vm594, %v589, %v591
    %v597 = vsel %vm594, %v591, %v593
    %v602 = vsel %vm85, %v585, 0
    %604 = vmatprep.subr.bf16.mxu0 %v596
    %605 = vmatpush1.bf16.msra.mxu0 %v595
    %606 = vmatprep.subr.bf16.mxu0 0
    %607 = vmatpush1.bf16.msra.mxu0 0
    %608 = vmatprep.subr.bf16.mxu0 0
    %609 = vmatpush1.bf16.msra.mxu0 0
    %610 = vmatprep.subr.bf16.mxu0 0
    %611 = vmatpush1.bf16.msra.mxu0 0
    %612 = vmatprep.subr.bf16.mxu0 0
    %613 = vmatpush1.bf16.msra.mxu0 0
    %614 = vmatprep.subr.bf16.mxu0 0
    %615 = vmatpush1.bf16.msra.mxu0 0
    %616 = vmatprep.subr.bf16.mxu0 0
    %617 = vmatpush1.bf16.msra.mxu0 0
    %618 = vmatprep.subr.bf16.mxu0 0
    %619 = vmatpush1.bf16.msra.mxu0 0
    %620 = vmatprep.subr.bf16.mxu0 0
    %621 = vmatpush1.bf16.msra.mxu0 0
    %622 = vmatprep.subr.bf16.mxu0 0
    %623 = vmatpush1.bf16.msra.mxu0 0
    %624 = vmatprep.subr.bf16.mxu0 0
    %625 = vmatpush1.bf16.msra.mxu0 0
    %626 = vmatprep.subr.bf16.mxu0 0
    %627 = vmatpush1.bf16.msra.mxu0 0
    %628 = vmatprep.subr.bf16.mxu0 0
    %629 = vmatpush1.bf16.msra.mxu0 0
    %630 = vmatprep.subr.bf16.mxu0 0
    %631 = vmatpush1.bf16.msra.mxu0 0
    %632 = vmatprep.subr.bf16.mxu0 0
    %633 = vmatpush1.bf16.msra.mxu0 0
    %634 = vmatprep.subr.bf16.mxu0 0
    %635 = vmatpush1.bf16.msra.mxu0 0
    %636 = vmatprep.mubr.bf16.mxu0 0
    %637 = vmatmul.mubr.bf16.gmra.mrb[0].mxu0 %v602
    %v638 = vpop.f32.mrb[0].mxu0
    %v639 = vadd.f32 0.0, %v638
    %v640 = vpop.f32.mrb[0].mxu0
    %v641 = vadd.f32 0.0, %v640
    %v642 = vpop.f32.mrb[0].mxu0
    %v643 = vpop.f32.mrb[0].mxu0
    %644 = vdwg.mxu0
    %645 = vmatprep.subr.bf16.mxu0 0
    %646 = vmatpush1.bf16.msra.mxu0 %v597
    %647 = vmatprep.subr.bf16.mxu0 0
    %648 = vmatpush1.bf16.msra.mxu0 0
    %649 = vmatprep.subr.bf16.mxu0 0
    %650 = vmatpush1.bf16.msra.mxu0 0
    %651 = vmatprep.subr.bf16.mxu0 0
    %652 = vmatpush1.bf16.msra.mxu0 0
    %653 = vmatprep.subr.bf16.mxu0 0
    %654 = vmatpush1.bf16.msra.mxu0 0
    %655 = vmatprep.subr.bf16.mxu0 0
    %656 = vmatpush1.bf16.msra.mxu0 0
    %657 = vmatprep.subr.bf16.mxu0 0
    %658 = vmatpush1.bf16.msra.mxu0 0
    %659 = vmatprep.subr.bf16.mxu0 0
    %660 = vmatpush1.bf16.msra.mxu0 0
    %661 = vmatprep.subr.bf16.mxu0 0
    %662 = vmatpush1.bf16.msra.mxu0 0
    %663 = vmatprep.subr.bf16.mxu0 0
    %664 = vmatpush1.bf16.msra.mxu0 0
    %665 = vmatprep.subr.bf16.mxu0 0
    %666 = vmatpush1.bf16.msra.mxu0 0
    %667 = vmatprep.subr.bf16.mxu0 0
    %668 = vmatpush1.bf16.msra.mxu0 0
    %669 = vmatprep.subr.bf16.mxu0 0
    %670 = vmatpush1.bf16.msra.mxu0 0
    %671 = vmatprep.subr.bf16.mxu0 0
    %672 = vmatpush1.bf16.msra.mxu0 0
    %673 = vmatprep.subr.bf16.mxu0 0
    %674 = vmatpush1.bf16.msra.mxu0 0
    %675 = vmatprep.subr.bf16.mxu0 0
    %676 = vmatpush1.bf16.msra.mxu0 0
    %677 = vmatprep.mubr.bf16.mxu0 0
    %678 = vmatmul.mubr.bf16.gmra.mrb[0].mxu0 %v602
    %v679 = vpop.f32.mrb[0].mxu0
    %v680 = vadd.f32 0.0, %v679
    %v681 = vpop.f32.mrb[0].mxu0
    %v682 = vpop.f32.mrb[0].mxu0
    %v683 = vpop.f32.mrb[0].mxu0
    %684 = vdwg.mxu0
    %v685 = vadd.f32 %v579, %v639
    %v686 = vadd.f32 %v580, %v641
    %v687 = vadd.f32 %v581, %v680
    %v688 = vld [vmem:[#allocation5] sm:$0x8]
    %v690 = vunpack.c.l.b16 %v688
    %v691 = vpack.c.b16 %v690, %v690
    %v692 = vrot.slane %v691, 3
    %693 = vrot.lane.b32.xlu0 %v66, 92
    %v694 = vpop.permute.xlu0 %693
    %695 = vrot.lane.b32.xlu0 %v67, 92
    %v696 = vpop.permute.xlu0 %695
    %697 = vrot.lane.b32.xlu0 %v68, 92
    %v698 = vpop.permute.xlu0 %697
    %699 = vrot.lane.b32.xlu0 %v69, 92
    %v700 = vpop.permute.xlu0 %699
    %vm701 = vcmask 752640
    %v702 = vsel %vm701, %v694, %v696
    %v703 = vsel %vm701, %v696, %v698
    %v704 = vsel %vm701, %v698, %v700
    %v709 = vsel %vm85, %v692, 0
    %711 = vmatprep.subr.bf16.mxu0 %v703
    %712 = vmatpush1.bf16.msra.mxu0 %v702
    %713 = vmatprep.subr.bf16.mxu0 0
    %714 = vmatpush1.bf16.msra.mxu0 0
    %715 = vmatprep.subr.bf16.mxu0 0
    %716 = vmatpush1.bf16.msra.mxu0 0
    %717 = vmatprep.subr.bf16.mxu0 0
    %718 = vmatpush1.bf16.msra.mxu0 0
    %719 = vmatprep.subr.bf16.mxu0 0
    %720 = vmatpush1.bf16.msra.mxu0 0
    %721 = vmatprep.subr.bf16.mxu0 0
    %722 = vmatpush1.bf16.msra.mxu0 0
    %723 = vmatprep.subr.bf16.mxu0 0
    %724 = vmatpush1.bf16.msra.mxu0 0
    %725 = vmatprep.subr.bf16.mxu0 0
    %726 = vmatpush1.bf16.msra.mxu0 0
    %727 = vmatprep.subr.bf16.mxu0 0
    %728 = vmatpush1.bf16.msra.mxu0 0
    %729 = vmatprep.subr.bf16.mxu0 0
    %730 = vmatpush1.bf16.msra.mxu0 0
    %731 = vmatprep.subr.bf16.mxu0 0
    %732 = vmatpush1.bf16.msra.mxu0 0
    %733 = vmatprep.subr.bf16.mxu0 0
    %734 = vmatpush1.bf16.msra.mxu0 0
    %735 = vmatprep.subr.bf16.mxu0 0
    %736 = vmatpush1.bf16.msra.mxu0 0
    %737 = vmatprep.subr.bf16.mxu0 0
    %738 = vmatpush1.bf16.msra.mxu0 0
    %739 = vmatprep.subr.bf16.mxu0 0
    %740 = vmatpush1.bf16.msra.mxu0 0
    %741 = vmatprep.subr.bf16.mxu0 0
    %742 = vmatpush1.bf16.msra.mxu0 0
    %743 = vmatprep.mubr.bf16.mxu0 0
    %744 = vmatmul.mubr.bf16.gmra.mrb[0].mxu0 %v709
    %v745 = vpop.f32.mrb[0].mxu0
    %v746 = vadd.f32 0.0, %v745
    %v747 = vpop.f32.mrb[0].mxu0
    %v748 = vadd.f32 0.0, %v747
    %v749 = vpop.f32.mrb[0].mxu0
    %v750 = vpop.f32.mrb[0].mxu0
    %751 = vdwg.mxu0
    %752 = vmatprep.subr.bf16.mxu0 0
    %753 = vmatpush1.bf16.msra.mxu0 %v704
    %754 = vmatprep.subr.bf16.mxu0 0
    %755 = vmatpush1.bf16.msra.mxu0 0
    %756 = vmatprep.subr.bf16.mxu0 0
    %757 = vmatpush1.bf16.msra.mxu0 0
    %758 = vmatprep.subr.bf16.mxu0 0
    %759 = vmatpush1.bf16.msra.mxu0 0
    %760 = vmatprep.subr.bf16.mxu0 0
    %761 = vmatpush1.bf16.msra.mxu0 0
    %762 = vmatprep.subr.bf16.mxu0 0
    %763 = vmatpush1.bf16.msra.mxu0 0
    %764 = vmatprep.subr.bf16.mxu0 0
    %765 = vmatpush1.bf16.msra.mxu0 0
    %766 = vmatprep.subr.bf16.mxu0 0
    %767 = vmatpush1.bf16.msra.mxu0 0
    %768 = vmatprep.subr.bf16.mxu0 0
    %769 = vmatpush1.bf16.msra.mxu0 0
    %770 = vmatprep.subr.bf16.mxu0 0
    %771 = vmatpush1.bf16.msra.mxu0 0
    %772 = vmatprep.subr.bf16.mxu0 0
    %773 = vmatpush1.bf16.msra.mxu0 0
    %774 = vmatprep.subr.bf16.mxu0 0
    %775 = vmatpush1.bf16.msra.mxu0 0
    %776 = vmatprep.subr.bf16.mxu0 0
    %777 = vmatpush1.bf16.msra.mxu0 0
    %778 = vmatprep.subr.bf16.mxu0 0
    %779 = vmatpush1.bf16.msra.mxu0 0
    %780 = vmatprep.subr.bf16.mxu0 0
    %781 = vmatpush1.bf16.msra.mxu0 0
    %782 = vmatprep.subr.bf16.mxu0 0
    %783 = vmatpush1.bf16.msra.mxu0 0
    %784 = vmatprep.mubr.bf16.mxu0 0
    %785 = vmatmul.mubr.bf16.gmra.mrb[0].mxu0 %v709
    %v786 = vpop.f32.mrb[0].mxu0
    %v787 = vadd.f32 0.0, %v786
    %v788 = vpop.f32.mrb[0].mxu0
    %v789 = vpop.f32.mrb[0].mxu0
    %v790 = vpop.f32.mrb[0].mxu0
    %791 = vdwg.mxu0
    %v792 = vadd.f32 %v685, %v746
    %v793 = vadd.f32 %v686, %v748
    %v794 = vadd.f32 %v687, %v787
    %v796 = vshrl.u32 %v691, 16
    %v798 = vrot.slane %v796, 3
    %799 = vrot.lane.b32.xlu0 %v66, 91
    %v800 = vpop.permute.xlu0 %799
    %801 = vrot.lane.b32.xlu0 %v67, 91
    %v802 = vpop.permute.xlu0 %801
    %803 = vrot.lane.b32.xlu0 %v68, 91
    %v804 = vpop.permute.xlu0 %803
    %805 = vrot.lane.b32.xlu0 %v69, 91
    %v806 = vpop.permute.xlu0 %805
    %vm807 = vcmask 744448
    %v808 = vsel %vm807, %v800, %v802
    %v809 = vsel %vm807, %v802, %v804
    %v810 = vsel %vm807, %v804, %v806
    %v815 = vsel %vm85, %v798, 0
    %817 = vmatprep.subr.bf16.mxu0 %v809
    %818 = vmatpush1.bf16.msra.mxu0 %v808
    %819 = vmatprep.subr.bf16.mxu0 0
    %820 = vmatpush1.bf16.msra.mxu0 0
    %821 = vmatprep.subr.bf16.mxu0 0
    %822 = vmatpush1.bf16.msra.mxu0 0
    %823 = vmatprep.subr.bf16.mxu0 0
    %824 = vmatpush1.bf16.msra.mxu0 0
    %825 = vmatprep.subr.bf16.mxu0 0
    %826 = vmatpush1.bf16.msra.mxu0 0
    %827 = vmatprep.subr.bf16.mxu0 0
    %828 = vmatpush1.bf16.msra.mxu0 0
    %829 = vmatprep.subr.bf16.mxu0 0
    %830 = vmatpush1.bf16.msra.mxu0 0
    %831 = vmatprep.subr.bf16.mxu0 0
    %832 = vmatpush1.bf16.msra.mxu0 0
    %833 = vmatprep.subr.bf16.mxu0 0
    %834 = vmatpush1.bf16.msra.mxu0 0
    %835 = vmatprep.subr.bf16.mxu0 0
    %836 = vmatpush1.bf16.msra.mxu0 0
    %837 = vmatprep.subr.bf16.mxu0 0
    %838 = vmatpush1.bf16.msra.mxu0 0
    %839 = vmatprep.subr.bf16.mxu0 0
    %840 = vmatpush1.bf16.msra.mxu0 0
    %841 = vmatprep.subr.bf16.mxu0 0
    %842 = vmatpush1.bf16.msra.mxu0 0
    %843 = vmatprep.subr.bf16.mxu0 0
    %844 = vmatpush1.bf16.msra.mxu0 0
    %845 = vmatprep.subr.bf16.mxu0 0
    %846 = vmatpush1.bf16.msra.mxu0 0
    %847 = vmatprep.subr.bf16.mxu0 0
    %848 = vmatpush1.bf16.msra.mxu0 0
    %849 = vmatprep.mubr.bf16.mxu0 0
    %850 = vmatmul.mubr.bf16.gmra.mrb[0].mxu0 %v815
    %v851 = vpop.f32.mrb[0].mxu0
    %v852 = vadd.f32 0.0, %v851
    %v853 = vpop.f32.mrb[0].mxu0
    %v854 = vadd.f32 0.0, %v853
    %v855 = vpop.f32.mrb[0].mxu0
    %v856 = vpop.f32.mrb[0].mxu0
    %857 = vdwg.mxu0
    %858 = vmatprep.subr.bf16.mxu0 0
    %859 = vmatpush1.bf16.msra.mxu0 %v810
    %860 = vmatprep.subr.bf16.mxu0 0
    %861 = vmatpush1.bf16.msra.mxu0 0
    %862 = vmatprep.subr.bf16.mxu0 0
    %863 = vmatpush1.bf16.msra.mxu0 0
    %864 = vmatprep.subr.bf16.mxu0 0
    %865 = vmatpush1.bf16.msra.mxu0 0
    %866 = vmatprep.subr.bf16.mxu0 0
    %867 = vmatpush1.bf16.msra.mxu0 0
    %868 = vmatprep.subr.bf16.mxu0 0
    %869 = vmatpush1.bf16.msra.mxu0 0
    %870 = vmatprep.subr.bf16.mxu0 0
    %871 = vmatpush1.bf16.msra.mxu0 0
    %872 = vmatprep.subr.bf16.mxu0 0
    %873 = vmatpush1.bf16.msra.mxu0 0
    %874 = vmatprep.subr.bf16.mxu0 0
    %875 = vmatpush1.bf16.msra.mxu0 0
    %876 = vmatprep.subr.bf16.mxu0 0
    %877 = vmatpush1.bf16.msra.mxu0 0
    %878 = vmatprep.subr.bf16.mxu0 0
    %879 = vmatpush1.bf16.msra.mxu0 0
    %880 = vmatprep.subr.bf16.mxu0 0
    %881 = vmatpush1.bf16.msra.mxu0 0
    %882 = vmatprep.subr.bf16.mxu0 0
    %883 = vmatpush1.bf16.msra.mxu0 0
    %884 = vmatprep.subr.bf16.mxu0 0
    %885 = vmatpush1.bf16.msra.mxu0 0
    %886 = vmatprep.subr.bf16.mxu0 0
    %887 = vmatpush1.bf16.msra.mxu0 0
    %888 = vmatprep.subr.bf16.mxu0 0
    %889 = vmatpush1.bf16.msra.mxu0 0
    %890 = vmatprep.mubr.bf16.mxu0 0
    %891 = vmatmul.mubr.bf16.gmra.mrb[0].mxu0 %v815
    %v892 = vpop.f32.mrb[0].mxu0
    %v893 = vadd.f32 0.0, %v892
    %v894 = vpop.f32.mrb[0].mxu0
    %v895 = vpop.f32.mrb[0].mxu0
    %v896 = vpop.f32.mrb[0].mxu0
    %897 = vdwg.mxu0
    %v898 = vadd.f32 %v792, %v852
    %v899 = vadd.f32 %v793, %v854
    %v900 = vadd.f32 %v794, %v893
    %v901 = vld [vmem:[#allocation5 + $0x4] sm:$0x1]
    %902 = vrot.lane.b32.xlu0 %v66, 90
    %v903 = vpop.permute.xlu0 %902
    %904 = vrot.lane.b32.xlu0 %v67, 90
    %v905 = vpop.permute.xlu0 %904
    %906 = vrot.lane.b32.xlu0 %v68, 90
    %v907 = vpop.permute.xlu0 %906
    %908 = vrot.lane.b32.xlu0 %v69, 90
    %v909 = vpop.permute.xlu0 %908
    %vm910 = vcmask 736256
    %v911 = vsel %vm910, %v903, %v905
    %v912 = vsel %vm910, %v905, %v907
    %v913 = vsel %vm910, %v907, %v909
    %v918 = vsel %vm85, %v901, 0
    %920 = vmatprep.subr.bf16.mxu0 %v912
    %921 = vmatpush1.bf16.msra.mxu0 %v911
    %922 = vmatprep.subr.bf16.mxu0 0
    %923 = vmatpush1.bf16.msra.mxu0 0
    %924 = vmatprep.subr.bf16.mxu0 0
    %925 = vmatpush1.bf16.msra.mxu0 0
    %926 = vmatprep.subr.bf16.mxu0 0
    %927 = vmatpush1.bf16.msra.mxu0 0
    %928 = vmatprep.subr.bf16.mxu0 0
    %929 = vmatpush1.bf16.msra.mxu0 0
    %930 = vmatprep.subr.bf16.mxu0 0
    %931 = vmatpush1.bf16.msra.mxu0 0
    %932 = vmatprep.subr.bf16.mxu0 0
    %933 = vmatpush1.bf16.msra.mxu0 0
    %934 = vmatprep.subr.bf16.mxu0 0
    %935 = vmatpush1.bf16.msra.mxu0 0
    %936 = vmatprep.subr.bf16.mxu0 0
    %937 = vmatpush1.bf16.msra.mxu0 0
    %938 = vmatprep.subr.bf16.mxu0 0
    %939 = vmatpush1.bf16.msra.mxu0 0
    %940 = vmatprep.subr.bf16.mxu0 0
    %941 = vmatpush1.bf16.msra.mxu0 0
    %942 = vmatprep.subr.bf16.mxu0 0
    %943 = vmatpush1.bf16.msra.mxu0 0
    %944 = vmatprep.subr.bf16.mxu0 0
    %945 = vmatpush1.bf16.msra.mxu0 0
    %946 = vmatprep.subr.bf16.mxu0 0
    %947 = vmatpush1.bf16.msra.mxu0 0
    %948 = vmatprep.subr.bf16.mxu0 0
    %949 = vmatpush1.bf16.msra.mxu0 0
    %950 = vmatprep.subr.bf16.mxu0 0
    %951 = vmatpush1.bf16.msra.mxu0 0
    %952 = vmatprep.mubr.bf16.mxu0 0
    %953 = vmatmul.mubr.bf16.gmra.mrb[0].mxu0 %v918
    %v954 = vpop.f32.mrb[0].mxu0
    %v955 = vadd.f32 0.0, %v954
    %v956 = vpop.f32.mrb[0].mxu0
    %v957 = vadd.f32 0.0, %v956
    %v958 = vpop.f32.mrb[0].mxu0
    %v959 = vpop.f32.mrb[0].mxu0
    %960 = vdwg.mxu0
    %961 = vmatprep.subr.bf16.mxu0 0
    %962 = vmatpush1.bf16.msra.mxu0 %v913
    %963 = vmatprep.subr.bf16.mxu0 0
    %964 = vmatpush1.bf16.msra.mxu0 0
    %965 = vmatprep.subr.bf16.mxu0 0
    %966 = vmatpush1.bf16.msra.mxu0 0
    %967 = vmatprep.subr.bf16.mxu0 0
    %968 = vmatpush1.bf16.msra.mxu0 0
    %969 = vmatprep.subr.bf16.mxu0 0
    %970 = vmatpush1.bf16.msra.mxu0 0
    %971 = vmatprep.subr.bf16.mxu0 0
    %972 = vmatpush1.bf16.msra.mxu0 0
    %973 = vmatprep.subr.bf16.mxu0 0
    %974 = vmatpush1.bf16.msra.mxu0 0
    %975 = vmatprep.subr.bf16.mxu0 0
    %976 = vmatpush1.bf16.msra.mxu0 0
    %977 = vmatprep.subr.bf16.mxu0 0
    %978 = vmatpush1.bf16.msra.mxu0 0
    %979 = vmatprep.subr.bf16.mxu0 0
    %980 = vmatpush1.bf16.msra.mxu0 0
    %981 = vmatprep.subr.bf16.mxu0 0
    %982 = vmatpush1.bf16.msra.mxu0 0
    %983 = vmatprep.subr.bf16.mxu0 0
    %984 = vmatpush1.bf16.msra.mxu0 0
    %985 = vmatprep.subr.bf16.mxu0 0
    %986 = vmatpush1.bf16.msra.mxu0 0
    %987 = vmatprep.subr.bf16.mxu0 0
    %988 = vmatpush1.bf16.msra.mxu0 0
    %989 = vmatprep.subr.bf16.mxu0 0
    %990 = vmatpush1.bf16.msra.mxu0 0
    %991 = vmatprep.subr.bf16.mxu0 0
    %992 = vmatpush1.bf16.msra.mxu0 0
    %993 = vmatprep.mubr.bf16.mxu0 0
    %994 = vmatmul.mubr.bf16.gmra.mrb[0].mxu0 %v918
    %v995 = vpop.f32.mrb[0].mxu0
    %v996 = vadd.f32 0.0, %v995
    %v997 = vpop.f32.mrb[0].mxu0
    %v998 = vpop.f32.mrb[0].mxu0
    %v999 = vpop.f32.mrb[0].mxu0
    %1000 = vdwg.mxu0
    %v1001 = vadd.f32 %v898, %v955
    %v1002 = vadd.f32 %v899, %v957
    %v1003 = vadd.f32 %v900, %v996
    %s1004 = scalar_lea.vmem [#allocation2], 32
    %v1005 = vld [vmem:[%s1004] sm:$0xff]
    %v1006 = vld [vmem:[%s1004 + $0x8] sm:$0xf]
    %v1007 = vld [vmem:[%s1004 + $0x10] sm:$0xff]
    %v1008 = vld [vmem:[%s1004 + $0x18] sm:$0xf]
    %v1009 = vld [vmem:[%s1004 + $0x8] sm:$0xff]
    %v1010 = vld [vmem:[%s1004 + $0x18] sm:$0xff]
    %v1015 = vunpack.c.l.b16 %v1005
    %v1016 = vunpack.c.h.b16 %v1005
    %v1017 = vunpack.c.l.b16 %v1009
    %v1018 = vunpack.c.h.b16 %v1009
    %v1019 = vunpack.c.l.b16 %v1007
    %v1020 = vunpack.c.h.b16 %v1007
    %v1021 = vunpack.c.l.b16 %v1010
    %v1022 = vunpack.c.h.b16 %v1010
    %v1023 = vpack.c.b16 %v1019, %v1015
    %v1024 = vpack.c.b16 %v1020, %v1016
    %v1025 = vpack.c.b16 %v1021, %v1017
    %v1026 = vpack.c.b16 %v1022, %v1018
    %1027 = vrot.lane.b32.xlu0 %v1023, 127
    %v1028 = vpop.permute.xlu0 %1027
    %1029 = vrot.lane.b32.xlu0 %v1024, 127
    %v1030 = vpop.permute.xlu0 %1029
    %1031 = vrot.lane.b32.xlu0 %v1025, 127
    %v1032 = vpop.permute.xlu0 %1031
    %1033 = vrot.lane.b32.xlu0 %v1026, 127
    %v1034 = vpop.permute.xlu0 %1033
    %v1035 = vsel %vm78, %v1028, %v1030
    %v1036 = vsel %vm78, %v1030, %v1032
    %v1037 = vsel %vm78, %v1032, %v1034
    %1041 = vmatprep.subr.bf16.mxu0 %v1036
    %1042 = vmatpush1.bf16.msra.mxu0 %v1035
    %1043 = vmatprep.subr.bf16.mxu0 0
    %1044 = vmatpush1.bf16.msra.mxu0 0
    %1045 = vmatprep.subr.bf16.mxu0 0
    %1046 = vmatpush1.bf16.msra.mxu0 0
    %1047 = vmatprep.subr.bf16.mxu0 0
    %1048 = vmatpush1.bf16.msra.mxu0 0
    %1049 = vmatprep.subr.bf16.mxu0 0
    %1050 = vmatpush1.bf16.msra.mxu0 0
    %1051 = vmatprep.subr.bf16.mxu0 0
    %1052 = vmatpush1.bf16.msra.mxu0 0
    %1053 = vmatprep.subr.bf16.mxu0 0
    %1054 = vmatpush1.bf16.msra.mxu0 0
    %1055 = vmatprep.subr.bf16.mxu0 0
    %1056 = vmatpush1.bf16.msra.mxu0 0
    %1057 = vmatprep.subr.bf16.mxu0 0
    %1058 = vmatpush1.bf16.msra.mxu0 0
    %1059 = vmatprep.subr.bf16.mxu0 0
    %1060 = vmatpush1.bf16.msra.mxu0 0
    %1061 = vmatprep.subr.bf16.mxu0 0
    %1062 = vmatpush1.bf16.msra.mxu0 0
    %1063 = vmatprep.subr.bf16.mxu0 0
    %1064 = vmatpush1.bf16.msra.mxu0 0
    %1065 = vmatprep.subr.bf16.mxu0 0
    %1066 = vmatpush1.bf16.msra.mxu0 0
    %1067 = vmatprep.subr.bf16.mxu0 0
    %1068 = vmatpush1.bf16.msra.mxu0 0
    %1069 = vmatprep.subr.bf16.mxu0 0
    %1070 = vmatpush1.bf16.msra.mxu0 0
    %1071 = vmatprep.subr.bf16.mxu0 0
    %1072 = vmatpush1.bf16.msra.mxu0 0
    %1073 = vmatprep.mubr.bf16.mxu0 0
    %1074 = vmatmul.mubr.bf16.gmra.mrb[0].mxu0 %v87
    %v1075 = vpop.f32.mrb[0].mxu0
    %v1076 = vadd.f32 0.0, %v1075
    %v1077 = vpop.f32.mrb[0].mxu0
    %v1078 = vadd.f32 0.0, %v1077
    %v1079 = vpop.f32.mrb[0].mxu0
    %v1080 = vpop.f32.mrb[0].mxu0
    %1081 = vdwg.mxu0
    %1082 = vmatprep.subr.bf16.mxu0 0
    %1083 = vmatpush1.bf16.msra.mxu0 %v1037
    %1084 = vmatprep.subr.bf16.mxu0 0
    %1085 = vmatpush1.bf16.msra.mxu0 0
    %1086 = vmatprep.subr.bf16.mxu0 0
    %1087 = vmatpush1.bf16.msra.mxu0 0
    %1088 = vmatprep.subr.bf16.mxu0 0
    %1089 = vmatpush1.bf16.msra.mxu0 0
    %1090 = vmatprep.subr.bf16.mxu0 0
    %1091 = vmatpush1.bf16.msra.mxu0 0
    %1092 = vmatprep.subr.bf16.mxu0 0
    %1093 = vmatpush1.bf16.msra.mxu0 0
    %1094 = vmatprep.subr.bf16.mxu0 0
    %1095 = vmatpush1.bf16.msra.mxu0 0
    %1096 = vmatprep.subr.bf16.mxu0 0
    %1097 = vmatpush1.bf16.msra.mxu0 0
    %1098 = vmatprep.subr.bf16.mxu0 0
    %1099 = vmatpush1.bf16.msra.mxu0 0
    %1100 = vmatprep.subr.bf16.mxu0 0
    %1101 = vmatpush1.bf16.msra.mxu0 0
    %1102 = vmatprep.subr.bf16.mxu0 0
    %1103 = vmatpush1.bf16.msra.mxu0 0
    %1104 = vmatprep.subr.bf16.mxu0 0
    %1105 = vmatpush1.bf16.msra.mxu0 0
    %1106 = vmatprep.subr.bf16.mxu0 0
    %1107 = vmatpush1.bf16.msra.mxu0 0
    %1108 = vmatprep.subr.bf16.mxu0 0
    %1109 = vmatpush1.bf16.msra.mxu0 0
    %1110 = vmatprep.subr.bf16.mxu0 0
    %1111 = vmatpush1.bf16.msra.mxu0 0
    %1112 = vmatprep.subr.bf16.mxu0 0
    %1113 = vmatpush1.bf16.msra.mxu0 0
    %1114 = vmatprep.mubr.bf16.mxu0 0
    %1115 = vmatmul.mubr.bf16.gmra.mrb[0].mxu0 %v87
    %v1116 = vpop.f32.mrb[0].mxu0
    %v1117 = vadd.f32 0.0, %v1116
    %v1118 = vpop.f32.mrb[0].mxu0
    %v1119 = vpop.f32.mrb[0].mxu0
    %v1120 = vpop.f32.mrb[0].mxu0
    %1121 = vdwg.mxu0
    %v1124 = vunpack.c.l.b16 %v1006
    %v1125 = vunpack.c.l.b16 %v1008
    %v1126 = vpack.c.b16 %v1125, %v1124
    %1130 = vmatprep.subr.bf16.mxu0 %v1024
    %1131 = vmatpush1.bf16.msra.mxu0 %v1023
    %1132 = vmatprep.subr.bf16.mxu0 0
    %1133 = vmatpush1.bf16.msra.mxu0 0
    %1134 = vmatprep.subr.bf16.mxu0 0
    %1135 = vmatpush1.bf16.msra.mxu0 0
    %1136 = vmatprep.subr.bf16.mxu0 0
    %1137 = vmatpush1.bf16.msra.mxu0 0
    %1138 = vmatprep.subr.bf16.mxu0 0
    %1139 = vmatpush1.bf16.msra.mxu0 0
    %1140 = vmatprep.subr.bf16.mxu0 0
    %1141 = vmatpush1.bf16.msra.mxu0 0
    %1142 = vmatprep.subr.bf16.mxu0 0
    %1143 = vmatpush1.bf16.msra.mxu0 0
    %1144 = vmatprep.subr.bf16.mxu0 0
    %1145 = vmatpush1.bf16.msra.mxu0 0
    %1146 = vmatprep.subr.bf16.mxu0 0
    %1147 = vmatpush1.bf16.msra.mxu0 0
    %1148 = vmatprep.subr.bf16.mxu0 0
    %1149 = vmatpush1.bf16.msra.mxu0 0
    %1150 = vmatprep.subr.bf16.mxu0 0
    %1151 = vmatpush1.bf16.msra.mxu0 0
    %1152 = vmatprep.subr.bf16.mxu0 0
    %1153 = vmatpush1.bf16.msra.mxu0 0
    %1154 = vmatprep.subr.bf16.mxu0 0
    %1155 = vmatpush1.bf16.msra.mxu0 0
    %1156 = vmatprep.subr.bf16.mxu0 0
    %1157 = vmatpush1.bf16.msra.mxu0 0
    %1158 = vmatprep.subr.bf16.mxu0 0
    %1159 = vmatpush1.bf16.msra.mxu0 0
    %1160 = vmatprep.subr.bf16.mxu0 0
    %1161 = vmatpush1.bf16.msra.mxu0 0
    %1162 = vmatprep.mubr.bf16.mxu0 0
    %1163 = vmatmul.mubr.bf16.gmra.mrb[0].mxu0 %v179
    %v1164 = vpop.f32.mrb[0].mxu0
    %v1165 = vadd.f32 %v1076, %v1164
    %v1166 = vpop.f32.mrb[0].mxu0
    %v1167 = vadd.f32 %v1078, %v1166
    %v1168 = vpop.f32.mrb[0].mxu0
    %v1169 = vpop.f32.mrb[0].mxu0
    %1170 = vdwg.mxu0
    %1171 = vmatprep.subr.bf16.mxu0 0
    %1172 = vmatpush1.bf16.msra.mxu0 %v1126
    %1173 = vmatprep.subr.bf16.mxu0 0
    %1174 = vmatpush1.bf16.msra.mxu0 0
    %1175 = vmatprep.subr.bf16.mxu0 0
    %1176 = vmatpush1.bf16.msra.mxu0 0
    %1177 = vmatprep.subr.bf16.mxu0 0
    %1178 = vmatpush1.bf16.msra.mxu0 0
    %1179 = vmatprep.subr.bf16.mxu0 0
    %1180 = vmatpush1.bf16.msra.mxu0 0
    %1181 = vmatprep.subr.bf16.mxu0 0
    %1182 = vmatpush1.bf16.msra.mxu0 0
    %1183 = vmatprep.subr.bf16.mxu0 0
    %1184 = vmatpush1.bf16.msra.mxu0 0
    %1185 = vmatprep.subr.bf16.mxu0 0
    %1186 = vmatpush1.bf16.msra.mxu0 0
    %1187 = vmatprep.subr.bf16.mxu0 0
    %1188 = vmatpush1.bf16.msra.mxu0 0
    %1189 = vmatprep.subr.bf16.mxu0 0
    %1190 = vmatpush1.bf16.msra.mxu0 0
    %1191 = vmatprep.subr.bf16.mxu0 0
    %1192 = vmatpush1.bf16.msra.mxu0 0
    %1193 = vmatprep.subr.bf16.mxu0 0
    %1194 = vmatpush1.bf16.msra.mxu0 0
    %1195 = vmatprep.subr.bf16.mxu0 0
    %1196 = vmatpush1.bf16.msra.mxu0 0
    %1197 = vmatprep.subr.bf16.mxu0 0
    %1198 = vmatpush1.bf16.msra.mxu0 0
    %1199 = vmatprep.subr.bf16.mxu0 0
    %1200 = vmatpush1.bf16.msra.mxu0 0
    %1201 = vmatprep.subr.bf16.mxu0 0
    %1202 = vmatpush1.bf16.msra.mxu0 0
    %1203 = vmatprep.mubr.bf16.mxu0 0
    %1204 = vmatmul.mubr.bf16.gmra.mrb[0].mxu0 %v179
    %v1205 = vpop.f32.mrb[0].mxu0
    %v1206 = vadd.f32 %v1117, %v1205
    %v1207 = vpop.f32.mrb[0].mxu0
    %v1208 = vpop.f32.mrb[0].mxu0
    %v1209 = vpop.f32.mrb[0].mxu0
    %1210 = vdwg.mxu0
    %1211 = vrot.lane.b32.xlu0 %v1023, 126
    %v1212 = vpop.permute.xlu0 %1211
    %1213 = vrot.lane.b32.xlu0 %v1024, 126
    %v1214 = vpop.permute.xlu0 %1213
    %1215 = vrot.lane.b32.xlu0 %v1025, 126
    %v1216 = vpop.permute.xlu0 %1215
    %1217 = vrot.lane.b32.xlu0 %v1026, 126
    %v1218 = vpop.permute.xlu0 %1217
    %v1219 = vsel %vm275, %v1212, %v1214
    %v1220 = vsel %vm275, %v1214, %v1216
    %v1221 = vsel %vm275, %v1216, %v1218
    %1225 = vmatprep.subr.bf16.mxu0 %v1220
    %1226 = vmatpush1.bf16.msra.mxu0 %v1219
    %1227 = vmatprep.subr.bf16.mxu0 0
    %1228 = vmatpush1.bf16.msra.mxu0 0
    %1229 = vmatprep.subr.bf16.mxu0 0
    %1230 = vmatpush1.bf16.msra.mxu0 0
    %1231 = vmatprep.subr.bf16.mxu0 0
    %1232 = vmatpush1.bf16.msra.mxu0 0
    %1233 = vmatprep.subr.bf16.mxu0 0
    %1234 = vmatpush1.bf16.msra.mxu0 0
    %1235 = vmatprep.subr.bf16.mxu0 0
    %1236 = vmatpush1.bf16.msra.mxu0 0
    %1237 = vmatprep.subr.bf16.mxu0 0
    %1238 = vmatpush1.bf16.msra.mxu0 0
    %1239 = vmatprep.subr.bf16.mxu0 0
    %1240 = vmatpush1.bf16.msra.mxu0 0
    %1241 = vmatprep.subr.bf16.mxu0 0
    %1242 = vmatpush1.bf16.msra.mxu0 0
    %1243 = vmatprep.subr.bf16.mxu0 0
    %1244 = vmatpush1.bf16.msra.mxu0 0
    %1245 = vmatprep.subr.bf16.mxu0 0
    %1246 = vmatpush1.bf16.msra.mxu0 0
    %1247 = vmatprep.subr.bf16.mxu0 0
    %1248 = vmatpush1.bf16.msra.mxu0 0
    %1249 = vmatprep.subr.bf16.mxu0 0
    %1250 = vmatpush1.bf16.msra.mxu0 0
    %1251 = vmatprep.subr.bf16.mxu0 0
    %1252 = vmatpush1.bf16.msra.mxu0 0
    %1253 = vmatprep.subr.bf16.mxu0 0
    %1254 = vmatpush1.bf16.msra.mxu0 0
    %1255 = vmatprep.subr.bf16.mxu0 0
    %1256 = vmatpush1.bf16.msra.mxu0 0
    %1257 = vmatprep.mubr.bf16.mxu0 0
    %1258 = vmatmul.mubr.bf16.gmra.mrb[0].mxu0 %v283
    %v1259 = vpop.f32.mrb[0].mxu0
    %v1260 = vadd.f32 0.0, %v1259
    %v1261 = vpop.f32.mrb[0].mxu0
    %v1262 = vadd.f32 0.0, %v1261
    %v1263 = vpop.f32.mrb[0].mxu0
    %v1264 = vpop.f32.mrb[0].mxu0
    %1265 = vdwg.mxu0
    %1266 = vmatprep.subr.bf16.mxu0 0
    %1267 = vmatpush1.bf16.msra.mxu0 %v1221
    %1268 = vmatprep.subr.bf16.mxu0 0
    %1269 = vmatpush1.bf16.msra.mxu0 0
    %1270 = vmatprep.subr.bf16.mxu0 0
    %1271 = vmatpush1.bf16.msra.mxu0 0
    %1272 = vmatprep.subr.bf16.mxu0 0
    %1273 = vmatpush1.bf16.msra.mxu0 0
    %1274 = vmatprep.subr.bf16.mxu0 0
    %1275 = vmatpush1.bf16.msra.mxu0 0
    %1276 = vmatprep.subr.bf16.mxu0 0
    %1277 = vmatpush1.bf16.msra.mxu0 0
    %1278 = vmatprep.subr.bf16.mxu0 0
    %1279 = vmatpush1.bf16.msra.mxu0 0
    %1280 = vmatprep.subr.bf16.mxu0 0
    %1281 = vmatpush1.bf16.msra.mxu0 0
    %1282 = vmatprep.subr.bf16.mxu0 0
    %1283 = vmatpush1.bf16.msra.mxu0 0
    %1284 = vmatprep.subr.bf16.mxu0 0
    %1285 = vmatpush1.bf16.msra.mxu0 0
    %1286 = vmatprep.subr.bf16.mxu0 0
    %1287 = vmatpush1.bf16.msra.mxu0 0
    %1288 = vmatprep.subr.bf16.mxu0 0
    %1289 = vmatpush1.bf16.msra.mxu0 0
    %1290 = vmatprep.subr.bf16.mxu0 0
    %1291 = vmatpush1.bf16.msra.mxu0 0
    %1292 = vmatprep.subr.bf16.mxu0 0
    %1293 = vmatpush1.bf16.msra.mxu0 0
    %1294 = vmatprep.subr.bf16.mxu0 0
    %1295 = vmatpush1.bf16.msra.mxu0 0
    %1296 = vmatprep.subr.bf16.mxu0 0
    %1297 = vmatpush1.bf16.msra.mxu0 0
    %1298 = vmatprep.mubr.bf16.mxu0 0
    %1299 = vmatmul.mubr.bf16.gmra.mrb[0].mxu0 %v283
    %v1300 = vpop.f32.mrb[0].mxu0
    %v1301 = vadd.f32 0.0, %v1300
    %v1302 = vpop.f32.mrb[0].mxu0
    %v1303 = vpop.f32.mrb[0].mxu0
    %v1304 = vpop.f32.mrb[0].mxu0
    %1305 = vdwg.mxu0
    %v1306 = vadd.f32 %v1165, %v1260
    %v1307 = vadd.f32 %v1167, %v1262
    %v1308 = vadd.f32 %v1206, %v1301
    %1309 = vrot.lane.b32.xlu0 %v1023, 110
    %v1310 = vpop.permute.xlu0 %1309
    %1311 = vrot.lane.b32.xlu0 %v1024, 110
    %v1312 = vpop.permute.xlu0 %1311
    %1313 = vrot.lane.b32.xlu0 %v1025, 110
    %v1314 = vpop.permute.xlu0 %1313
    %1315 = vrot.lane.b32.xlu0 %v1026, 110
    %v1316 = vpop.permute.xlu0 %1315
    %v1317 = vsel %vm381, %v1310, %v1312
    %v1318 = vsel %vm381, %v1312, %v1314
    %v1319 = vsel %vm381, %v1314, %v1316
    %1323 = vmatprep.subr.bf16.mxu0 %v1318
    %1324 = vmatpush1.bf16.msra.mxu0 %v1317
    %1325 = vmatprep.subr.bf16.mxu0 0
    %1326 = vmatpush1.bf16.msra.mxu0 0
    %1327 = vmatprep.subr.bf16.mxu0 0
    %1328 = vmatpush1.bf16.msra.mxu0 0
    %1329 = vmatprep.subr.bf16.mxu0 0
    %1330 = vmatpush1.bf16.msra.mxu0 0
    %1331 = vmatprep.subr.bf16.mxu0 0
    %1332 = vmatpush1.bf16.msra.mxu0 0
    %1333 = vmatprep.subr.bf16.mxu0 0
    %1334 = vmatpush1.bf16.msra.mxu0 0
    %1335 = vmatprep.subr.bf16.mxu0 0
    %1336 = vmatpush1.bf16.msra.mxu0 0
    %1337 = vmatprep.subr.bf16.mxu0 0
    %1338 = vmatpush1.bf16.msra.mxu0 0
    %1339 = vmatprep.subr.bf16.mxu0 0
    %1340 = vmatpush1.bf16.msra.mxu0 0
    %1341 = vmatprep.subr.bf16.mxu0 0
    %1342 = vmatpush1.bf16.msra.mxu0 0
    %1343 = vmatprep.subr.bf16.mxu0 0
    %1344 = vmatpush1.bf16.msra.mxu0 0
    %1345 = vmatprep.subr.bf16.mxu0 0
    %1346 = vmatpush1.bf16.msra.mxu0 0
    %1347 = vmatprep.subr.bf16.mxu0 0
    %1348 = vmatpush1.bf16.msra.mxu0 0
    %1349 = vmatprep.subr.bf16.mxu0 0
    %1350 = vmatpush1.bf16.msra.mxu0 0
    %1351 = vmatprep.subr.bf16.mxu0 0
    %1352 = vmatpush1.bf16.msra.mxu0 0
    %1353 = vmatprep.subr.bf16.mxu0 0
    %1354 = vmatpush1.bf16.msra.mxu0 0
    %1355 = vmatprep.mubr.bf16.mxu0 0
    %1356 = vmatmul.mubr.bf16.gmra.mrb[0].mxu0 %v389
    %v1357 = vpop.f32.mrb[0].mxu0
    %v1358 = vadd.f32 0.0, %v1357
    %v1359 = vpop.f32.mrb[0].mxu0
    %v1360 = vadd.f32 0.0, %v1359
    %v1361 = vpop.f32.mrb[0].mxu0
    %v1362 = vpop.f32.mrb[0].mxu0
    %1363 = vdwg.mxu0
    %1364 = vmatprep.subr.bf16.mxu0 0
    %1365 = vmatpush1.bf16.msra.mxu0 %v1319
    %1366 = vmatprep.subr.bf16.mxu0 0
    %1367 = vmatpush1.bf16.msra.mxu0 0
    %1368 = vmatprep.subr.bf16.mxu0 0
    %1369 = vmatpush1.bf16.msra.mxu0 0
    %1370 = vmatprep.subr.bf16.mxu0 0
    %1371 = vmatpush1.bf16.msra.mxu0 0
    %1372 = vmatprep.subr.bf16.mxu0 0
    %1373 = vmatpush1.bf16.msra.mxu0 0
    %1374 = vmatprep.subr.bf16.mxu0 0
    %1375 = vmatpush1.bf16.msra.mxu0 0
    %1376 = vmatprep.subr.bf16.mxu0 0
    %1377 = vmatpush1.bf16.msra.mxu0 0
    %1378 = vmatprep.subr.bf16.mxu0 0
    %1379 = vmatpush1.bf16.msra.mxu0 0
    %1380 = vmatprep.subr.bf16.mxu0 0
    %1381 = vmatpush1.bf16.msra.mxu0 0
    %1382 = vmatprep.subr.bf16.mxu0 0
    %1383 = vmatpush1.bf16.msra.mxu0 0
    %1384 = vmatprep.subr.bf16.mxu0 0
    %1385 = vmatpush1.bf16.msra.mxu0 0
    %1386 = vmatprep.subr.bf16.mxu0 0
    %1387 = vmatpush1.bf16.msra.mxu0 0
    %1388 = vmatprep.subr.bf16.mxu0 0
    %1389 = vmatpush1.bf16.msra.mxu0 0
    %1390 = vmatprep.subr.bf16.mxu0 0
    %1391 = vmatpush1.bf16.msra.mxu0 0
    %1392 = vmatprep.subr.bf16.mxu0 0
    %1393 = vmatpush1.bf16.msra.mxu0 0
    %1394 = vmatprep.subr.bf16.mxu0 0
    %1395 = vmatpush1.bf16.msra.mxu0 0
    %1396 = vmatprep.mubr.bf16.mxu0 0
    %1397 = vmatmul.mubr.bf16.gmra.mrb[0].mxu0 %v389
    %v1398 = vpop.f32.mrb[0].mxu0
    %v1399 = vadd.f32 0.0, %v1398
    %v1400 = vpop.f32.mrb[0].mxu0
    %v1401 = vpop.f32.mrb[0].mxu0
    %v1402 = vpop.f32.mrb[0].mxu0
    %1403 = vdwg.mxu0
    %v1404 = vadd.f32 %v1306, %v1358
    %v1405 = vadd.f32 %v1307, %v1360
    %v1406 = vadd.f32 %v1308, %v1399
    %1407 = vrot.lane.b32.xlu0 %v1023, 109
    %v1408 = vpop.permute.xlu0 %1407
    %1409 = vrot.lane.b32.xlu0 %v1024, 109
    %v1410 = vpop.permute.xlu0 %1409
    %1411 = vrot.lane.b32.xlu0 %v1025, 109
    %v1412 = vpop.permute.xlu0 %1411
    %1413 = vrot.lane.b32.xlu0 %v1026, 109
    %v1414 = vpop.permute.xlu0 %1413
    %v1415 = vsel %vm488, %v1408, %v1410
    %v1416 = vsel %vm488, %v1410, %v1412
    %v1417 = vsel %vm488, %v1412, %v1414
    %1421 = vmatprep.subr.bf16.mxu0 %v1416
    %1422 = vmatpush1.bf16.msra.mxu0 %v1415
    %1423 = vmatprep.subr.bf16.mxu0 0
    %1424 = vmatpush1.bf16.msra.mxu0 0
    %1425 = vmatprep.subr.bf16.mxu0 0
    %1426 = vmatpush1.bf16.msra.mxu0 0
    %1427 = vmatprep.subr.bf16.mxu0 0
    %1428 = vmatpush1.bf16.msra.mxu0 0
    %1429 = vmatprep.subr.bf16.mxu0 0
    %1430 = vmatpush1.bf16.msra.mxu0 0
    %1431 = vmatprep.subr.bf16.mxu0 0
    %1432 = vmatpush1.bf16.msra.mxu0 0
    %1433 = vmatprep.subr.bf16.mxu0 0
    %1434 = vmatpush1.bf16.msra.mxu0 0
    %1435 = vmatprep.subr.bf16.mxu0 0
    %1436 = vmatpush1.bf16.msra.mxu0 0
    %1437 = vmatprep.subr.bf16.mxu0 0
    %1438 = vmatpush1.bf16.msra.mxu0 0
    %1439 = vmatprep.subr.bf16.mxu0 0
    %1440 = vmatpush1.bf16.msra.mxu0 0
    %1441 = vmatprep.subr.bf16.mxu0 0
    %1442 = vmatpush1.bf16.msra.mxu0 0
    %1443 = vmatprep.subr.bf16.mxu0 0
    %1444 = vmatpush1.bf16.msra.mxu0 0
    %1445 = vmatprep.subr.bf16.mxu0 0
    %1446 = vmatpush1.bf16.msra.mxu0 0
    %1447 = vmatprep.subr.bf16.mxu0 0
    %1448 = vmatpush1.bf16.msra.mxu0 0
    %1449 = vmatprep.subr.bf16.mxu0 0
    %1450 = vmatpush1.bf16.msra.mxu0 0
    %1451 = vmatprep.subr.bf16.mxu0 0
    %1452 = vmatpush1.bf16.msra.mxu0 0
    %1453 = vmatprep.mubr.bf16.mxu0 0
    %1454 = vmatmul.mubr.bf16.gmra.mrb[0].mxu0 %v496
    %v1455 = vpop.f32.mrb[0].mxu0
    %v1456 = vadd.f32 0.0, %v1455
    %v1457 = vpop.f32.mrb[0].mxu0
    %v1458 = vadd.f32 0.0, %v1457
    %v1459 = vpop.f32.mrb[0].mxu0
    %v1460 = vpop.f32.mrb[0].mxu0
    %1461 = vdwg.mxu0
    %1462 = vmatprep.subr.bf16.mxu0 0
    %1463 = vmatpush1.bf16.msra.mxu0 %v1417
    %1464 = vmatprep.subr.bf16.mxu0 0
    %1465 = vmatpush1.bf16.msra.mxu0 0
    %1466 = vmatprep.subr.bf16.mxu0 0
    %1467 = vmatpush1.bf16.msra.mxu0 0
    %1468 = vmatprep.subr.bf16.mxu0 0
    %1469 = vmatpush1.bf16.msra.mxu0 0
    %1470 = vmatprep.subr.bf16.mxu0 0
    %1471 = vmatpush1.bf16.msra.mxu0 0
    %1472 = vmatprep.subr.bf16.mxu0 0
    %1473 = vmatpush1.bf16.msra.mxu0 0
    %1474 = vmatprep.subr.bf16.mxu0 0
    %1475 = vmatpush1.bf16.msra.mxu0 0
    %1476 = vmatprep.subr.bf16.mxu0 0
    %1477 = vmatpush1.bf16.msra.mxu0 0
    %1478 = vmatprep.subr.bf16.mxu0 0
    %1479 = vmatpush1.bf16.msra.mxu0 0
    %1480 = vmatprep.subr.bf16.mxu0 0
    %1481 = vmatpush1.bf16.msra.mxu0 0
    %1482 = vmatprep.subr.bf16.mxu0 0
    %1483 = vmatpush1.bf16.msra.mxu0 0
    %1484 = vmatprep.subr.bf16.mxu0 0
    %1485 = vmatpush1.bf16.msra.mxu0 0
    %1486 = vmatprep.subr.bf16.mxu0 0
    %1487 = vmatpush1.bf16.msra.mxu0 0
    %1488 = vmatprep.subr.bf16.mxu0 0
    %1489 = vmatpush1.bf16.msra.mxu0 0
    %1490 = vmatprep.subr.bf16.mxu0 0
    %1491 = vmatpush1.bf16.msra.mxu0 0
    %1492 = vmatprep.subr.bf16.mxu0 0
    %1493 = vmatpush1.bf16.msra.mxu0 0
    %1494 = vmatprep.mubr.bf16.mxu0 0
    %1495 = vmatmul.mubr.bf16.gmra.mrb[0].mxu0 %v496
    %v1496 = vpop.f32.mrb[0].mxu0
    %v1497 = vadd.f32 0.0, %v1496
    %v1498 = vpop.f32.mrb[0].mxu0
    %v1499 = vpop.f32.mrb[0].mxu0
    %v1500 = vpop.f32.mrb[0].mxu0
    %1501 = vdwg.mxu0
    %v1502 = vadd.f32 %v1404, %v1456
    %v1503 = vadd.f32 %v1405, %v1458
    %v1504 = vadd.f32 %v1406, %v1497
    %1505 = vrot.lane.b32.xlu0 %v1023, 108
    %v1506 = vpop.permute.xlu0 %1505
    %1507 = vrot.lane.b32.xlu0 %v1024, 108
    %v1508 = vpop.permute.xlu0 %1507
    %1509 = vrot.lane.b32.xlu0 %v1025, 108
    %v1510 = vpop.permute.xlu0 %1509
    %1511 = vrot.lane.b32.xlu0 %v1026, 108
    %v1512 = vpop.permute.xlu0 %1511
    %v1513 = vsel %vm594, %v1506, %v1508
    %v1514 = vsel %vm594, %v1508, %v1510
    %v1515 = vsel %vm594, %v1510, %v1512
    %1519 = vmatprep.subr.bf16.mxu0 %v1514
    %1520 = vmatpush1.bf16.msra.mxu0 %v1513
    %1521 = vmatprep.subr.bf16.mxu0 0
    %1522 = vmatpush1.bf16.msra.mxu0 0
    %1523 = vmatprep.subr.bf16.mxu0 0
    %1524 = vmatpush1.bf16.msra.mxu0 0
    %1525 = vmatprep.subr.bf16.mxu0 0
    %1526 = vmatpush1.bf16.msra.mxu0 0
    %1527 = vmatprep.subr.bf16.mxu0 0
    %1528 = vmatpush1.bf16.msra.mxu0 0
    %1529 = vmatprep.subr.bf16.mxu0 0
    %1530 = vmatpush1.bf16.msra.mxu0 0
    %1531 = vmatprep.subr.bf16.mxu0 0
    %1532 = vmatpush1.bf16.msra.mxu0 0
    %1533 = vmatprep.subr.bf16.mxu0 0
    %1534 = vmatpush1.bf16.msra.mxu0 0
    %1535 = vmatprep.subr.bf16.mxu0 0
    %1536 = vmatpush1.bf16.msra.mxu0 0
    %1537 = vmatprep.subr.bf16.mxu0 0
    %1538 = vmatpush1.bf16.msra.mxu0 0
    %1539 = vmatprep.subr.bf16.mxu0 0
    %1540 = vmatpush1.bf16.msra.mxu0 0
    %1541 = vmatprep.subr.bf16.mxu0 0
    %1542 = vmatpush1.bf16.msra.mxu0 0
    %1543 = vmatprep.subr.bf16.mxu0 0
    %1544 = vmatpush1.bf16.msra.mxu0 0
    %1545 = vmatprep.subr.bf16.mxu0 0
    %1546 = vmatpush1.bf16.msra.mxu0 0
    %1547 = vmatprep.subr.bf16.mxu0 0
    %1548 = vmatpush1.bf16.msra.mxu0 0
    %1549 = vmatprep.subr.bf16.mxu0 0
    %1550 = vmatpush1.bf16.msra.mxu0 0
    %1551 = vmatprep.mubr.bf16.mxu0 0
    %1552 = vmatmul.mubr.bf16.gmra.mrb[0].mxu0 %v602
    %v1553 = vpop.f32.mrb[0].mxu0
    %v1554 = vadd.f32 0.0, %v1553
    %v1555 = vpop.f32.mrb[0].mxu0
    %v1556 = vadd.f32 0.0, %v1555
    %v1557 = vpop.f32.mrb[0].mxu0
    %v1558 = vpop.f32.mrb[0].mxu0
    %1559 = vdwg.mxu0
    %1560 = vmatprep.subr.bf16.mxu0 0
    %1561 = vmatpush1.bf16.msra.mxu0 %v1515
    %1562 = vmatprep.subr.bf16.mxu0 0
    %1563 = vmatpush1.bf16.msra.mxu0 0
    %1564 = vmatprep.subr.bf16.mxu0 0
    %1565 = vmatpush1.bf16.msra.mxu0 0
    %1566 = vmatprep.subr.bf16.mxu0 0
    %1567 = vmatpush1.bf16.msra.mxu0 0
    %1568 = vmatprep.subr.bf16.mxu0 0
    %1569 = vmatpush1.bf16.msra.mxu0 0
    %1570 = vmatprep.subr.bf16.mxu0 0
    %1571 = vmatpush1.bf16.msra.mxu0 0
    %1572 = vmatprep.subr.bf16.mxu0 0
    %1573 = vmatpush1.bf16.msra.mxu0 0
    %1574 = vmatprep.subr.bf16.mxu0 0
    %1575 = vmatpush1.bf16.msra.mxu0 0
    %1576 = vmatprep.subr.bf16.mxu0 0
    %1577 = vmatpush1.bf16.msra.mxu0 0
    %1578 = vmatprep.subr.bf16.mxu0 0
    %1579 = vmatpush1.bf16.msra.mxu0 0
    %1580 = vmatprep.subr.bf16.mxu0 0
    %1581 = vmatpush1.bf16.msra.mxu0 0
    %1582 = vmatprep.subr.bf16.mxu0 0
    %1583 = vmatpush1.bf16.msra.mxu0 0
    %1584 = vmatprep.subr.bf16.mxu0 0
    %1585 = vmatpush1.bf16.msra.mxu0 0
    %1586 = vmatprep.subr.bf16.mxu0 0
    %1587 = vmatpush1.bf16.msra.mxu0 0
    %1588 = vmatprep.subr.bf16.mxu0 0
    %1589 = vmatpush1.bf16.msra.mxu0 0
    %1590 = vmatprep.subr.bf16.mxu0 0
    %1591 = vmatpush1.bf16.msra.mxu0 0
    %1592 = vmatprep.mubr.bf16.mxu0 0
    %1593 = vmatmul.mubr.bf16.gmra.mrb[0].mxu0 %v602
    %v1594 = vpop.f32.mrb[0].mxu0
    %v1595 = vadd.f32 0.0, %v1594
    %v1596 = vpop.f32.mrb[0].mxu0
    %v1597 = vpop.f32.mrb[0].mxu0
    %v1598 = vpop.f32.mrb[0].mxu0
    %1599 = vdwg.mxu0
    %v1600 = vadd.f32 %v1502, %v1554
    %v1601 = vadd.f32 %v1503, %v1556
    %v1602 = vadd.f32 %v1504, %v1595
    %1603 = vrot.lane.b32.xlu0 %v1023, 92
    %v1604 = vpop.permute.xlu0 %1603
    %1605 = vrot.lane.b32.xlu0 %v1024, 92
    %v1606 = vpop.permute.xlu0 %1605
    %1607 = vrot.lane.b32.xlu0 %v1025, 92
    %v1608 = vpop.permute.xlu0 %1607
    %1609 = vrot.lane.b32.xlu0 %v1026, 92
    %v1610 = vpop.permute.xlu0 %1609
    %v1611 = vsel %vm701, %v1604, %v1606
    %v1612 = vsel %vm701, %v1606, %v1608
    %v1613 = vsel %vm701, %v1608, %v1610
    %1617 = vmatprep.subr.bf16.mxu0 %v1612
    %1618 = vmatpush1.bf16.msra.mxu0 %v1611
    %1619 = vmatprep.subr.bf16.mxu0 0
    %1620 = vmatpush1.bf16.msra.mxu0 0
    %1621 = vmatprep.subr.bf16.mxu0 0
    %1622 = vmatpush1.bf16.msra.mxu0 0
    %1623 = vmatprep.subr.bf16.mxu0 0
    %1624 = vmatpush1.bf16.msra.mxu0 0
    %1625 = vmatprep.subr.bf16.mxu0 0
    %1626 = vmatpush1.bf16.msra.mxu0 0
    %1627 = vmatprep.subr.bf16.mxu0 0
    %1628 = vmatpush1.bf16.msra.mxu0 0
    %1629 = vmatprep.subr.bf16.mxu0 0
    %1630 = vmatpush1.bf16.msra.mxu0 0
    %1631 = vmatprep.subr.bf16.mxu0 0
    %1632 = vmatpush1.bf16.msra.mxu0 0
    %1633 = vmatprep.subr.bf16.mxu0 0
    %1634 = vmatpush1.bf16.msra.mxu0 0
    %1635 = vmatprep.subr.bf16.mxu0 0
    %1636 = vmatpush1.bf16.msra.mxu0 0
    %1637 = vmatprep.subr.bf16.mxu0 0
    %1638 = vmatpush1.bf16.msra.mxu0 0
    %1639 = vmatprep.subr.bf16.mxu0 0
    %1640 = vmatpush1.bf16.msra.mxu0 0
    %1641 = vmatprep.subr.bf16.mxu0 0
    %1642 = vmatpush1.bf16.msra.mxu0 0
    %1643 = vmatprep.subr.bf16.mxu0 0
    %1644 = vmatpush1.bf16.msra.mxu0 0
    %1645 = vmatprep.subr.bf16.mxu0 0
    %1646 = vmatpush1.bf16.msra.mxu0 0
    %1647 = vmatprep.subr.bf16.mxu0 0
    %1648 = vmatpush1.bf16.msra.mxu0 0
    %1649 = vmatprep.mubr.bf16.mxu0 0
    %1650 = vmatmul.mubr.bf16.gmra.mrb[0].mxu0 %v709
    %v1651 = vpop.f32.mrb[0].mxu0
    %v1652 = vadd.f32 0.0, %v1651
    %v1653 = vpop.f32.mrb[0].mxu0
    %v1654 = vadd.f32 0.0, %v1653
    %v1655 = vpop.f32.mrb[0].mxu0
    %v1656 = vpop.f32.mrb[0].mxu0
    %1657 = vdwg.mxu0
    %1658 = vmatprep.subr.bf16.mxu0 0
    %1659 = vmatpush1.bf16.msra.mxu0 %v1613
    %1660 = vmatprep.subr.bf16.mxu0 0
    %1661 = vmatpush1.bf16.msra.mxu0 0
    %1662 = vmatprep.subr.bf16.mxu0 0
    %1663 = vmatpush1.bf16.msra.mxu0 0
    %1664 = vmatprep.subr.bf16.mxu0 0
    %1665 = vmatpush1.bf16.msra.mxu0 0
    %1666 = vmatprep.subr.bf16.mxu0 0
    %1667 = vmatpush1.bf16.msra.mxu0 0
    %1668 = vmatprep.subr.bf16.mxu0 0
    %1669 = vmatpush1.bf16.msra.mxu0 0
    %1670 = vmatprep.subr.bf16.mxu0 0
    %1671 = vmatpush1.bf16.msra.mxu0 0
    %1672 = vmatprep.subr.bf16.mxu0 0
    %1673 = vmatpush1.bf16.msra.mxu0 0
    %1674 = vmatprep.subr.bf16.mxu0 0
    %1675 = vmatpush1.bf16.msra.mxu0 0
    %1676 = vmatprep.subr.bf16.mxu0 0
    %1677 = vmatpush1.bf16.msra.mxu0 0
    %1678 = vmatprep.subr.bf16.mxu0 0
    %1679 = vmatpush1.bf16.msra.mxu0 0
    %1680 = vmatprep.subr.bf16.mxu0 0
    %1681 = vmatpush1.bf16.msra.mxu0 0
    %1682 = vmatprep.subr.bf16.mxu0 0
    %1683 = vmatpush1.bf16.msra.mxu0 0
    %1684 = vmatprep.subr.bf16.mxu0 0
    %1685 = vmatpush1.bf16.msra.mxu0 0
    %1686 = vmatprep.subr.bf16.mxu0 0
    %1687 = vmatpush1.bf16.msra.mxu0 0
    %1688 = vmatprep.subr.bf16.mxu0 0
    %1689 = vmatpush1.bf16.msra.mxu0 0
    %1690 = vmatprep.mubr.bf16.mxu0 0
    %1691 = vmatmul.mubr.bf16.gmra.mrb[0].mxu0 %v709
    %v1692 = vpop.f32.mrb[0].mxu0
    %v1693 = vadd.f32 0.0, %v1692
    %v1694 = vpop.f32.mrb[0].mxu0
    %v1695 = vpop.f32.mrb[0].mxu0
    %v1696 = vpop.f32.mrb[0].mxu0
    %1697 = vdwg.mxu0
    %v1698 = vadd.f32 %v1600, %v1652
    %v1699 = vadd.f32 %v1601, %v1654
    %v1700 = vadd.f32 %v1602, %v1693
    %1701 = vrot.lane.b32.xlu0 %v1023, 91
    %v1702 = vpop.permute.xlu0 %1701
    %1703 = vrot.lane.b32.xlu0 %v1024, 91
    %v1704 = vpop.permute.xlu0 %1703
    %1705 = vrot.lane.b32.xlu0 %v1025, 91
    %v1706 = vpop.permute.xlu0 %1705
    %1707 = vrot.lane.b32.xlu0 %v1026, 91
    %v1708 = vpop.permute.xlu0 %1707
    %v1709 = vsel %vm807, %v1702, %v1704
    %v1710 = vsel %vm807, %v1704, %v1706
    %v1711 = vsel %vm807, %v1706, %v1708
    %1715 = vmatprep.subr.bf16.mxu0 %v1710
    %1716 = vmatpush1.bf16.msra.mxu0 %v1709
    %1717 = vmatprep.subr.bf16.mxu0 0
    %1718 = vmatpush1.bf16.msra.mxu0 0
    %1719 = vmatprep.subr.bf16.mxu0 0
    %1720 = vmatpush1.bf16.msra.mxu0 0
    %1721 = vmatprep.subr.bf16.mxu0 0
    %1722 = vmatpush1.bf16.msra.mxu0 0
    %1723 = vmatprep.subr.bf16.mxu0 0
    %1724 = vmatpush1.bf16.msra.mxu0 0
    %1725 = vmatprep.subr.bf16.mxu0 0
    %1726 = vmatpush1.bf16.msra.mxu0 0
    %1727 = vmatprep.subr.bf16.mxu0 0
    %1728 = vmatpush1.bf16.msra.mxu0 0
    %1729 = vmatprep.subr.bf16.mxu0 0
    %1730 = vmatpush1.bf16.msra.mxu0 0
    %1731 = vmatprep.subr.bf16.mxu0 0
    %1732 = vmatpush1.bf16.msra.mxu0 0
    %1733 = vmatprep.subr.bf16.mxu0 0
    %1734 = vmatpush1.bf16.msra.mxu0 0
    %1735 = vmatprep.subr.bf16.mxu0 0
    %1736 = vmatpush1.bf16.msra.mxu0 0
    %1737 = vmatprep.subr.bf16.mxu0 0
    %1738 = vmatpush1.bf16.msra.mxu0 0
    %1739 = vmatprep.subr.bf16.mxu0 0
    %1740 = vmatpush1.bf16.msra.mxu0 0
    %1741 = vmatprep.subr.bf16.mxu0 0
    %1742 = vmatpush1.bf16.msra.mxu0 0
    %1743 = vmatprep.subr.bf16.mxu0 0
    %1744 = vmatpush1.bf16.msra.mxu0 0
    %1745 = vmatprep.subr.bf16.mxu0 0
    %1746 = vmatpush1.bf16.msra.mxu0 0
    %1747 = vmatprep.mubr.bf16.mxu0 0
    %1748 = vmatmul.mubr.bf16.gmra.mrb[0].mxu0 %v815
    %v1749 = vpop.f32.mrb[0].mxu0
    %v1750 = vadd.f32 0.0, %v1749
    %v1751 = vpop.f32.mrb[0].mxu0
    %v1752 = vadd.f32 0.0, %v1751
    %v1753 = vpop.f32.mrb[0].mxu0
    %v1754 = vpop.f32.mrb[0].mxu0
    %1755 = vdwg.mxu0
    %1756 = vmatprep.subr.bf16.mxu0 0
    %1757 = vmatpush1.bf16.msra.mxu0 %v1711
    %1758 = vmatprep.subr.bf16.mxu0 0
    %1759 = vmatpush1.bf16.msra.mxu0 0
    %1760 = vmatprep.subr.bf16.mxu0 0
    %1761 = vmatpush1.bf16.msra.mxu0 0
    %1762 = vmatprep.subr.bf16.mxu0 0
    %1763 = vmatpush1.bf16.msra.mxu0 0
    %1764 = vmatprep.subr.bf16.mxu0 0
    %1765 = vmatpush1.bf16.msra.mxu0 0
    %1766 = vmatprep.subr.bf16.mxu0 0
    %1767 = vmatpush1.bf16.msra.mxu0 0
    %1768 = vmatprep.subr.bf16.mxu0 0
    %1769 = vmatpush1.bf16.msra.mxu0 0
    %1770 = vmatprep.subr.bf16.mxu0 0
    %1771 = vmatpush1.bf16.msra.mxu0 0
    %1772 = vmatprep.subr.bf16.mxu0 0
    %1773 = vmatpush1.bf16.msra.mxu0 0
    %1774 = vmatprep.subr.bf16.mxu0 0
    %1775 = vmatpush1.bf16.msra.mxu0 0
    %1776 = vmatprep.subr.bf16.mxu0 0
    %1777 = vmatpush1.bf16.msra.mxu0 0
    %1778 = vmatprep.subr.bf16.mxu0 0
    %1779 = vmatpush1.bf16.msra.mxu0 0
    %1780 = vmatprep.subr.bf16.mxu0 0
    %1781 = vmatpush1.bf16.msra.mxu0 0
    %1782 = vmatprep.subr.bf16.mxu0 0
    %1783 = vmatpush1.bf16.msra.mxu0 0
    %1784 = vmatprep.subr.bf16.mxu0 0
    %1785 = vmatpush1.bf16.msra.mxu0 0
    %1786 = vmatprep.subr.bf16.mxu0 0
    %1787 = vmatpush1.bf16.msra.mxu0 0
    %1788 = vmatprep.mubr.bf16.mxu0 0
    %1789 = vmatmul.mubr.bf16.gmra.mrb[0].mxu0 %v815
    %v1790 = vpop.f32.mrb[0].mxu0
    %v1791 = vadd.f32 0.0, %v1790
    %v1792 = vpop.f32.mrb[0].mxu0
    %v1793 = vpop.f32.mrb[0].mxu0
    %v1794 = vpop.f32.mrb[0].mxu0
    %1795 = vdwg.mxu0
    %v1796 = vadd.f32 %v1698, %v1750
    %v1797 = vadd.f32 %v1699, %v1752
    %v1798 = vadd.f32 %v1700, %v1791
    %1799 = vrot.lane.b32.xlu0 %v1023, 90
    %v1800 = vpop.permute.xlu0 %1799
    %1801 = vrot.lane.b32.xlu0 %v1024, 90
    %v1802 = vpop.permute.xlu0 %1801
    %1803 = vrot.lane.b32.xlu0 %v1025, 90
    %v1804 = vpop.permute.xlu0 %1803
    %1805 = vrot.lane.b32.xlu0 %v1026, 90
    %v1806 = vpop.permute.xlu0 %1805
    %v1807 = vsel %vm910, %v1800, %v1802
    %v1808 = vsel %vm910, %v1802, %v1804
    %v1809 = vsel %vm910, %v1804, %v1806
    %1813 = vmatprep.subr.bf16.mxu0 %v1808
    %1814 = vmatpush1.bf16.msra.mxu0 %v1807
    %1815 = vmatprep.subr.bf16.mxu0 0
    %1816 = vmatpush1.bf16.msra.mxu0 0
    %1817 = vmatprep.subr.bf16.mxu0 0
    %1818 = vmatpush1.bf16.msra.mxu0 0
    %1819 = vmatprep.subr.bf16.mxu0 0
    %1820 = vmatpush1.bf16.msra.mxu0 0
    %1821 = vmatprep.subr.bf16.mxu0 0
    %1822 = vmatpush1.bf16.msra.mxu0 0
    %1823 = vmatprep.subr.bf16.mxu0 0
    %1824 = vmatpush1.bf16.msra.mxu0 0
    %1825 = vmatprep.subr.bf16.mxu0 0
    %1826 = vmatpush1.bf16.msra.mxu0 0
    %1827 = vmatprep.subr.bf16.mxu0 0
    %1828 = vmatpush1.bf16.msra.mxu0 0
    %1829 = vmatprep.subr.bf16.mxu0 0
    %1830 = vmatpush1.bf16.msra.mxu0 0
    %1831 = vmatprep.subr.bf16.mxu0 0
    %1832 = vmatpush1.bf16.msra.mxu0 0
    %1833 = vmatprep.subr.bf16.mxu0 0
    %1834 = vmatpush1.bf16.msra.mxu0 0
    %1835 = vmatprep.subr.bf16.mxu0 0
    %1836 = vmatpush1.bf16.msra.mxu0 0
    %1837 = vmatprep.subr.bf16.mxu0 0
    %1838 = vmatpush1.bf16.msra.mxu0 0
    %1839 = vmatprep.subr.bf16.mxu0 0
    %1840 = vmatpush1.bf16.msra.mxu0 0
    %1841 = vmatprep.subr.bf16.mxu0 0
    %1842 = vmatpush1.bf16.msra.mxu0 0
    %1843 = vmatprep.subr.bf16.mxu0 0
    %1844 = vmatpush1.bf16.msra.mxu0 0
    %1845 = vmatprep.mubr.bf16.mxu0 0
    %1846 = vmatmul.mubr.bf16.gmra.mrb[0].mxu0 %v918
    %v1847 = vpop.f32.mrb[0].mxu0
    %v1848 = vadd.f32 0.0, %v1847
    %v1849 = vpop.f32.mrb[0].mxu0
    %v1850 = vadd.f32 0.0, %v1849
    %v1851 = vpop.f32.mrb[0].mxu0
    %v1852 = vpop.f32.mrb[0].mxu0
    %1853 = vdwg.mxu0
    %1854 = vmatprep.subr.bf16.mxu0 0
    %1855 = vmatpush1.bf16.msra.mxu0 %v1809
    %1856 = vmatprep.subr.bf16.mxu0 0
    %1857 = vmatpush1.bf16.msra.mxu0 0
    %1858 = vmatprep.subr.bf16.mxu0 0
    %1859 = vmatpush1.bf16.msra.mxu0 0
    %1860 = vmatprep.subr.bf16.mxu0 0
    %1861 = vmatpush1.bf16.msra.mxu0 0
    %1862 = vmatprep.subr.bf16.mxu0 0
    %1863 = vmatpush1.bf16.msra.mxu0 0
    %1864 = vmatprep.subr.bf16.mxu0 0
    %1865 = vmatpush1.bf16.msra.mxu0 0
    %1866 = vmatprep.subr.bf16.mxu0 0
    %1867 = vmatpush1.bf16.msra.mxu0 0
    %1868 = vmatprep.subr.bf16.mxu0 0
    %1869 = vmatpush1.bf16.msra.mxu0 0
    %1870 = vmatprep.subr.bf16.mxu0 0
    %1871 = vmatpush1.bf16.msra.mxu0 0
    %1872 = vmatprep.subr.bf16.mxu0 0
    %1873 = vmatpush1.bf16.msra.mxu0 0
    %1874 = vmatprep.subr.bf16.mxu0 0
    %1875 = vmatpush1.bf16.msra.mxu0 0
    %1876 = vmatprep.subr.bf16.mxu0 0
    %1877 = vmatpush1.bf16.msra.mxu0 0
    %1878 = vmatprep.subr.bf16.mxu0 0
    %1879 = vmatpush1.bf16.msra.mxu0 0
    %1880 = vmatprep.subr.bf16.mxu0 0
    %1881 = vmatpush1.bf16.msra.mxu0 0
    %1882 = vmatprep.subr.bf16.mxu0 0
    %1883 = vmatpush1.bf16.msra.mxu0 0
    %1884 = vmatprep.subr.bf16.mxu0 0
    %1885 = vmatpush1.bf16.msra.mxu0 0
    %1886 = vmatprep.mubr.bf16.mxu0 0
    %1887 = vmatmul.mubr.bf16.gmra.mrb[0].mxu0 %v918
    %v1888 = vpop.f32.mrb[0].mxu0
    %v1889 = vadd.f32 0.0, %v1888
    %v1890 = vpop.f32.mrb[0].mxu0
    %v1891 = vpop.f32.mrb[0].mxu0
    %v1892 = vpop.f32.mrb[0].mxu0
    %1893 = vdwg.mxu0
    %v1894 = vadd.f32 %v1796, %v1848
    %v1895 = vadd.f32 %v1797, %v1850
    %v1896 = vadd.f32 %v1798, %v1889
    %v1900 = vrot.slane %v1894, 7
    %v1901 = vrot.slane %v1895, 7
    %v1902 = vrot.slane %v1896, 7
    %vm1906 = vcmask 1040384
    %v1907 = vsel %vm1906, %v1001, %v1900
    %v1908 = vsel %vm1906, %v1002, %v1901
    %v1909 = vsel %vm1906, %v1003, %v1902
    %v1910 = vsub.f32 0.0, %v1907
    %v1911 = vsub.f32 0.0, %v1908
    %v1912 = vsub.f32 0.0, %v1909
    %v1913 = vmul.f32 %v1910, 1.442695
    %v1914 = vpow.pop %v1913
    %v1915 = vmul.f32 %v1911, 1.442695
    %v1916 = vpow.pop %v1915
    %v1917 = vmul.f32 %v1912, 1.442695
    %v1918 = vpow.pop %v1917
    %v1919 = vadd.f32 %v1914, 1.0
    %v1920 = vadd.f32 %v1916, 1.0
    %v1921 = vadd.f32 %v1918, 1.0
    %v1922 = vrcp.pop %v1919
    %v1923 = vrcp.pop %v1920
    %v1924 = vrcp.pop %v1921
    %v1928 = vcombine.low %v1922, %v1923
    %v1930 = vunpack.c.l.s4 1983009808
    %v1931 = vunpack.c.0.s8 %v1930
    %v1932 = vlaneseq
    %v1933 = vshrl.u32 %v1932, 7
    %v1934 = vsub.s32 %v1931, %v1933
    %v1935 = vrot.slane %v1928, %v1934
    %v1937 = vunpack.c.l.s4 1983009808
    %v1938 = vunpack.c.0.s8 %v1937
    %v1939 = vlaneseq
    %v1940 = vshrl.u32 %v1939, 7
    %v1941 = vsub.s32 %v1938, %v1940
    %v1942 = vrot.slane %v1924, %v1941
    %v1943 = vcombine.low %v1935, %v1942
    %1945 = vst [vmem:[#allocation7] sm:$0x3f] %v1943
    // Predicated region
    $region18: #{tpu_custom_call.1} parent=1 // pred_check
      _
    $region19: #{tpu_custom_call.1} parent=1 // pred_check_branch
      %1947 = sbr.rel (0) target = $region21
    $region20: #{tpu_custom_call.1} parent=1 // pred_region
      %s1949 = ssub.s32 96, 96
      %1950 = vsyncadd [#allocation4], %s1949
      %s1952 = sshll.u32 [#allocation7], 4
      %s1953 = int_to_ptr.vmem [resolvable:$true] %s1952
      %1955 = dma.vmem_to_hbm [thread:$0]  %s1953, 96, %s2, [#allocation4]
    $region21: #{tpu_custom_call.1} parent=1 // pred_fallthru
      _
    // Predicated region
    $region22: #{tpu_custom_call.1} parent=1 // pred_check
      _
    $region23: #{tpu_custom_call.1} parent=1 // pred_check_branch
      %1957 = sbr.rel (0) target = $region25
    $region24: #{tpu_custom_call.1} parent=1 // pred_region
      %1958 = dma.done [#allocation4], 96
    $region25: #{tpu_custom_call.1} parent=1 // pred_fallthru
      _
    %1959 = vsyncpa [#allocation3], 1
    %1960 = vsyncpa [#allocation6], 1
    %1961 = vsyncpa [#allocation4], 1

</llo_original>
